<compile_context>
chip_gen: v7x
topology: tpu7x:2x2x1
jax: 0.10.0
libtpu: 0.0.40
codegen_flags: <defaults>
</compile_context>

<pallas_src>
import jax
import jax.numpy as jnp
from jax.experimental import pallas as pl
from jax.experimental.pallas import tpu as pltpu


def _make_softmax_matmul_kernel(heads_per_step, head_dim):
    G, D = heads_per_step, head_dim

    def kernel(s_ref, v_ref, o_ref, vaug_ref):
        # s_ref:    (G, S, S)   scores
        # v_ref:    (G, S, D)   values
        # o_ref:    (G, S, D)   output
        # vaug_ref: (G, S, 2*D) bf16 scratch holding [V | 1] per head
        S = s_ref.shape[1]
        for g in range(G):  # static unroll over heads packed in this step
            # Build the ones-augmented V so the MXU computes the softmax
            # denominator in the same matmul (no XLU cross-lane row-sum).
            vaug_ref[g, :, :D] = v_ref[g].astype(jnp.bfloat16)
            vaug_ref[g, :, D:] = jnp.ones((S, D), dtype=jnp.bfloat16)

            s = s_ref[g].astype(jnp.float32)            # (S, S) f32
            m = jnp.max(s, axis=-1, keepdims=True)      # (S, 1) row max (XLU)
            e = jnp.exp(s - m).astype(jnp.bfloat16)     # EUP exp, bf16 MXU operand
            # dropout (p=0.1) -> identity in eval/inference mode

            acc = jnp.dot(e, vaug_ref[g],
                          preferred_element_type=jnp.float32)   # (S, 2*D) f32
            num = acc[:, :D]                            # softmax numerator @ V
            denom = acc[:, D:]                          # row-sum, replicated over D lanes
            inv = pl.reciprocal(denom, approx=True)     # EUP vrcp
            o_ref[g] = (num * inv).astype(o_ref.dtype)

    return kernel


def _pick_heads_per_step(num_heads):
    """Per-generation grid depth (see perf notes at top of file)."""
    try:
        kind = jax.devices()[0].device_kind.lower()
    except Exception:  # pragma: no cover - defensive
        kind = ""
    if "v7" in kind:
        g = 1              # 2 TCs: keep >=2 steps per core for DMA/compute overlap
    elif "v6" in kind or "v5" in kind:
        g = 2              # 1 TC: amortize per-step overhead
    else:
        g = 1
    # Fall back to a divisor of num_heads.
    g = max(1, min(g, num_heads))
    while num_heads % g != 0:
        g -= 1
    return g


def softmax_dropout_matmul(scores, values, heads_per_step=None):
    """scores: [B, H, S, S], values: [B, H, S, D] -> softmax(scores) @ values."""
    B, H, S, S2 = scores.shape
    assert S == S2
    _, _, _, D = values.shape
    BH = B * H

    G = heads_per_step if heads_per_step is not None else _pick_heads_per_step(BH)
    assert BH % G == 0
    num_steps = BH // G

    s_flat = scores.reshape(BH, S, S)
    v_flat = values.reshape(BH, S, D)

    out = pl.pallas_call(
        _make_softmax_matmul_kernel(G, D),
        out_shape=jax.ShapeDtypeStruct((BH, S, D), values.dtype),
        grid_spec=pltpu.PrefetchScalarGridSpec(
            num_scalar_prefetch=0,
            grid=(num_steps,),
            in_specs=[
                pl.BlockSpec((G, S, S), lambda i: (i, 0, 0)),
                pl.BlockSpec((G, S, D), lambda i: (i, 0, 0)),
            ],
            out_specs=pl.BlockSpec((G, S, D), lambda i: (i, 0, 0)),
            scratch_shapes=[pltpu.VMEM((G, S, 2 * D), jnp.bfloat16)],
        ),
        compiler_params=pltpu.CompilerParams(
            dimension_semantics=("parallel",),
        ),
    )(s_flat, v_flat)

    return out.reshape(B, H, S, D)


if __name__ == "__main__":
    # Shapes implied by the module: [1, 4, 384, 384] scores, [1, 4, 384, 64] values
    B, H, S, D = 1, 4, 384, 64
    key = jax.random.PRNGKey(0)
    k1, k2 = jax.random.split(key)
    x52 = jax.random.normal(k1, (B, H, S, S), dtype=jnp.float32)  # scores
    x42 = jax.random.normal(k2, (B, H, S, D), dtype=jnp.float32)  # values

    out = softmax_dropout_matmul(x52, x42)
    out = jax.block_until_ready(out)

    # Reference check (eval-mode dropout == identity); tolerance accounts for
    # bf16 MXU operands (f32 accumulation, consistent numerator/denominator
    # precision) and the approx EUP reciprocal.
    ref = jnp.einsum("bhqk,bhkd->bhqd", jax.nn.softmax(x52, axis=-1), x42)
    assert out.shape == (B, H, S, D)
    assert jnp.allclose(out, ref, atol=2e-2, rtol=2e-2)

    print("KERNEL_OK")
</pallas_src>

<mosaic_0001>
module attributes {stable_mosaic.version = 11 : i64} {
  func.func @kernel(%arg0: i32, %arg1: memref<1x384x384xf32, #tpu.memory_space<vmem>>, %arg2: memref<1x384x64xf32, #tpu.memory_space<vmem>>, %arg3: memref<1x384x64xf32, #tpu.memory_space<vmem>>, %arg4: memref<1x384x128xbf16, #tpu.memory_space<vmem>>) attributes {dimension_semantics = [#tpu.dimension_semantics<parallel>], iteration_bounds = array<i64: 4>, scalar_prefetch = 0 : i64, scratch_operands = 1 : i64, tpu.core_type = #tpu.core_type<tc>, window_params = [{transform_indices = @transform_0, window_bounds = array<i64: 1, 384, 384>}, {transform_indices = @transform_1, window_bounds = array<i64: 1, 384, 64>}, {transform_indices = @transform_2, window_bounds = array<i64: 1, 384, 64>}]} {
    %c0 = arith.constant 0 : index
    %c0_0 = arith.constant 0 : index
    %c0_1 = arith.constant 0 : index
    %0 = vector.load %arg2[%c0, %c0_0, %c0_1] : memref<1x384x64xf32, #tpu.memory_space<vmem>>, vector<1x384x64xf32>
    %1 = vector.shape_cast %0 : vector<1x384x64xf32> to vector<384x64xf32>
    %2 = arith.truncf %1 : vector<384x64xf32> to vector<384x64xbf16>
    %c0_2 = arith.constant 0 : index
    %c0_3 = arith.constant 0 : index
    %c0_4 = arith.constant 0 : index
    %3 = vector.load %arg4[%c0_2, %c0_3, %c0_4] : memref<1x384x128xbf16, #tpu.memory_space<vmem>>, vector<1x384x64xbf16>
    %4 = vector.shape_cast %3 : vector<1x384x64xbf16> to vector<384x64xbf16>
    %5 = vector.shape_cast %2 : vector<384x64xbf16> to vector<1x384x64xbf16>
    tpu.vector_store %arg4[%c0_2, %c0_3, %c0_4], %5 {strides = array<i32>} : memref<1x384x128xbf16, #tpu.memory_space<vmem>>, vector<1x384x64xbf16>,
    %cst = arith.constant 1.000000e+00 : bf16
    %6 = vector.broadcast %cst : bf16 to vector<384x64xbf16>
    %c0_5 = arith.constant 0 : index
    %c0_6 = arith.constant 0 : index
    %c64 = arith.constant 64 : index
    %7 = vector.load %arg4[%c0_5, %c0_6, %c64] : memref<1x384x128xbf16, #tpu.memory_space<vmem>>, vector<1x384x64xbf16>
    %8 = vector.shape_cast %7 : vector<1x384x64xbf16> to vector<384x64xbf16>
    %9 = vector.shape_cast %6 : vector<384x64xbf16> to vector<1x384x64xbf16>
    tpu.vector_store %arg4[%c0_5, %c0_6, %c64], %9 {strides = array<i32>} : memref<1x384x128xbf16, #tpu.memory_space<vmem>>, vector<1x384x64xbf16>,
    %c0_7 = arith.constant 0 : index
    %c0_8 = arith.constant 0 : index
    %c0_9 = arith.constant 0 : index
    %10 = vector.load %arg1[%c0_7, %c0_8, %c0_9] : memref<1x384x384xf32, #tpu.memory_space<vmem>>, vector<1x384x384xf32>
    %11 = vector.shape_cast %10 : vector<1x384x384xf32> to vector<384x384xf32>
    %cst_10 = arith.constant dense<0xFF800000> : vector<384xf32>
    %12 = vector.multi_reduction <maximumf>, %11, %cst_10 [1] : vector<384x384xf32> to vector<384xf32>
    %13 = vector.shape_cast %12 : vector<384xf32> to vector<384x1xf32>
    %14 = vector.broadcast %13 : vector<384x1xf32> to vector<384x384xf32>
    %15 = arith.subf %11, %14 : vector<384x384xf32>
    %16 = math.exp %15 : vector<384x384xf32>
    %17 = arith.truncf %16 : vector<384x384xf32> to vector<384x384xbf16>
    %c0_11 = arith.constant 0 : index
    %c0_12 = arith.constant 0 : index
    %c0_13 = arith.constant 0 : index
    %18 = vector.load %arg4[%c0_11, %c0_12, %c0_13] : memref<1x384x128xbf16, #tpu.memory_space<vmem>>, vector<1x384x128xbf16>
    %19 = vector.shape_cast %18 : vector<1x384x128xbf16> to vector<384x128xbf16>
    %cst_14 = arith.constant dense<0.000000e+00> : vector<384x128xf32>
    %20 = tpu.matmul %17, %19, %cst_14 {dimension_numbers = #tpu.dot_dimension_numbers<[1], [0], [0], [1], [0, 0, 1, 1], [], []>} : vector<384x384xbf16>, vector<384x128xbf16>, vector<384x128xf32> -> vector<384x128xf32>
    %21 = vector.extract_strided_slice %20 {offsets = [0, 0], sizes = [384, 64], strides = [1, 1]} : vector<384x128xf32> to vector<384x64xf32>
    %22 = vector.extract_strided_slice %20 {offsets = [0, 64], sizes = [384, 64], strides = [1, 1]} : vector<384x128xf32> to vector<384x64xf32>
    %23 = tpu.reciprocal %22 {approx = true} : vector<384x64xf32> -> vector<384x64xf32>
    %24 = arith.mulf %21, %23 : vector<384x64xf32>
    %c0_15 = arith.constant 0 : index
    %c0_16 = arith.constant 0 : index
    %c0_17 = arith.constant 0 : index
    %25 = vector.load %arg3[%c0_15, %c0_16, %c0_17] : memref<1x384x64xf32, #tpu.memory_space<vmem>>, vector<1x384x64xf32>
    %26 = vector.shape_cast %25 : vector<1x384x64xf32> to vector<384x64xf32>
    %27 = vector.shape_cast %24 : vector<384x64xf32> to vector<1x384x64xf32>
    tpu.vector_store %arg3[%c0_15, %c0_16, %c0_17], %27 {strides = array<i32>} : memref<1x384x64xf32, #tpu.memory_space<vmem>>, vector<1x384x64xf32>,
    return
  }
  func.func @transform_0(%arg0: i32) -> (i32, i32, i32) {
    %c0_i32 = arith.constant 0 : i32
    %c0_i32_0 = arith.constant 0 : i32
    %c0_i32_1 = arith.constant 0 : i32
    return %arg0, %c0_i32, %c0_i32_0 : i32, i32, i32
  }
  func.func @transform_1(%arg0: i32) -> (i32, i32, i32) {
    %c0_i32 = arith.constant 0 : i32
    %c0_i32_0 = arith.constant 0 : i32
    %c0_i32_1 = arith.constant 0 : i32
    return %arg0, %c0_i32, %c0_i32_0 : i32, i32, i32
  }
  func.func @transform_2(%arg0: i32) -> (i32, i32, i32) {
    %c0_i32 = arith.constant 0 : i32
    %c0_i32_0 = arith.constant 0 : i32
    %c0_i32_1 = arith.constant 0 : i32
    return %arg0, %c0_i32, %c0_i32_0 : i32, i32, i32
  }
}

</mosaic_0001>

<llo_original>
// kernel: tpu_custom_call.1
$region0: #{tpu_custom_call.1}
  #allocation0 [shape = 'u32[]', space=smem, size = 0x4, offset = 0x4, fixed_abs, tag = 'smem constant byte address 0x4 - core index']
  #allocation1 [shape = 'u32[144,128]{1,0:T(1,128)}', space=vmem, size = 0x12000, scoped, tag = 'internal scratch']
  #allocation2 [shape = 'bf16[1,384,128]{2,1,0:T(16,128)(2,1)}', space=vmem, size = 0x18000, scoped, tag = 'scratch operand']
  %s0 = inlined_call_operand.hbm [shape: f32[4,384,384], index: 0, kind: input, shape index: {}]
  %s1 = inlined_call_operand.vmem [shape: f32[4,384,64], index: 1, kind: input, shape index: {}]
  %s2 = inlined_call_operand.vmem [shape: f32[4,384,64], index: 2, kind: output, shape index: {}]
  %s3 = sld [smem:[#allocation0]]
  $region45: #{tpu_custom_call.1} parent=0
    _
  %s5 = ssub.s32 1, %s3
  %s6 = scalar_select 0, %s5, %s3
  $region1: #{tpu_custom_call.1} parent=0
    #allocation3 [shape = 'u8[1179648]{0}', space=vmem, size = 0x120000, scoped, tag = 'input window, operand 0']
    #allocation4 [shape = 's32[2]{0}', space=sflag, size = 0x8, scoped, tag = 'scoped memory for tpu_custom_call.1']
    %7 = vsyncpa [#allocation4], 0
    %s8 = scalar_lea.sflag [#allocation4], 1
    %9 = vsyncpa %s8, 0
    loop: start=0, step=1, limit=6
    $region2: #{tpu_custom_call.1} parent=1 // loop_pre_header
      _
    $region3: #{tpu_custom_call.1} parent=1 // loop_header
      %s11 = sphi 0, %s15
      %p12 = scmp.ge.s32.totalorder %s11, 6
      %s21 = sphi 0, %s23
      %s24 = sphi 0, %s21
      %s25 = sphi 0, %s24
      %s41 = sphi 0, %s25
      %s47 = sphi 0, %s49
      %s50 = sphi 0, %s47
      %s51 = sphi 0, %s50
      %s67 = sphi 0, %s51
      %s73 = sphi 0, %s75
      %s76 = sphi 0, %s73
      %s77 = sphi 0, %s76
      %s93 = sphi 0, %s77
    $region4: #{tpu_custom_call.1} parent=1 // loop_header_branch
      %14 = sbr.rel (%p12) target = $region8
    $region5: #{tpu_custom_call.1} parent=1 // loop_body
      %s16 = ssub.s32 %s11, 1
      %s17 = ssub.s32 %s11, 2
      %s18 = sadd.s32 %s11, 1
      %s19 = ssub.s32 %s11, %s18
      %p20 = scmp.eq.s32.totalorder %s19, 0
      %s22 = sadd.s32 %s21, 1
      %s23 = scalar_select %p20, %s21, %s22
      %p26 = pneg %p20
      %p27 = scmp.eq.s32.totalorder %s11, 3
      %p28 = por %p26, %p27
      %p29 = scmp.ne.s32.totalorder %s21, %s24
      %p30 = scmp.eq.s32.totalorder %s11, 0
      %p31 = por %p29, %p30
      %p32 = scmp.ne.s32.totalorder %s21, %s24
      %p33 = scmp.eq.s32.totalorder %s16, 3
      %p34 = por %p32, %p33
      %p35 = scmp.ne.s32.totalorder %s24, %s25
      %p36 = scmp.eq.s32.totalorder %s16, 0
      %p37 = por %p35, %p36
      %p38 = scmp.ne.s32.totalorder %s24, %s25
      %p39 = scmp.eq.s32.totalorder %s17, 3
      %p40 = por %p38, %p39
      %p42 = scmp.ne.s32.totalorder %s25, %s41
      %p43 = scmp.eq.s32.totalorder %s17, 0
      %p44 = por %p42, %p43
      %s45 = ssub.s32 %s11, %s18
      %p46 = scmp.eq.s32.totalorder %s45, 0
      %s48 = sadd.s32 %s47, 1
      %s49 = scalar_select %p46, %s47, %s48
      %p52 = pneg %p46
      %p53 = scmp.eq.s32.totalorder %s11, 3
      %p54 = por %p52, %p53
      %p55 = scmp.ne.s32.totalorder %s47, %s50
      %p56 = scmp.eq.s32.totalorder %s11, 0
      %p57 = por %p55, %p56
      %p58 = scmp.ne.s32.totalorder %s47, %s50
      %p59 = scmp.eq.s32.totalorder %s16, 3
      %p60 = por %p58, %p59
      %p61 = scmp.ne.s32.totalorder %s50, %s51
      %p62 = scmp.eq.s32.totalorder %s16, 0
      %p63 = por %p61, %p62
      %p64 = scmp.ne.s32.totalorder %s50, %s51
      %p65 = scmp.eq.s32.totalorder %s17, 3
      %p66 = por %p64, %p65
      %p68 = scmp.ne.s32.totalorder %s51, %s67
      %p69 = scmp.eq.s32.totalorder %s17, 0
      %p70 = por %p68, %p69
      %s71 = ssub.s32 %s11, %s18
      %p72 = scmp.eq.s32.totalorder %s71, 0
      %s74 = sadd.s32 %s73, 1
      %s75 = scalar_select %p72, %s73, %s74
      %p78 = pneg %p72
      %p79 = scmp.eq.s32.totalorder %s11, 3
      %p80 = por %p78, %p79
      %p81 = scmp.ne.s32.totalorder %s73, %s76
      %p82 = scmp.eq.s32.totalorder %s11, 0
      %p83 = por %p81, %p82
      %p84 = scmp.ne.s32.totalorder %s73, %s76
      %p85 = scmp.eq.s32.totalorder %s16, 3
      %p86 = por %p84, %p85
      %p87 = scmp.ne.s32.totalorder %s76, %s77
      %p88 = scmp.eq.s32.totalorder %s16, 0
      %p89 = por %p87, %p88
      %p90 = scmp.ne.s32.totalorder %s76, %s77
      %p91 = scmp.eq.s32.totalorder %s17, 3
      %p92 = por %p90, %p91
      %p94 = scmp.ne.s32.totalorder %s77, %s93
      %p95 = scmp.eq.s32.totalorder %s17, 0
      %p96 = por %p94, %p95
      %p97 = scmp.le.s32.totalorder 1, %s11
      %p98 = scmp.lt.s32.totalorder %s11, 5
      %p99 = pnand %p97, %p98
      %p100 = pneg %p99
      // Predicated region
      $region9: #{tpu_custom_call.1} parent=5 // pred_check
        _
      $region10: #{tpu_custom_call.1} parent=5 // pred_check_branch
        %102 = sbr.rel (%p99) target = $region12
      $region11: #{tpu_custom_call.1} parent=5 // pred_region
        %s103 = ssub.s32 %s11, 1
      $region12: #{tpu_custom_call.1} parent=5 // pred_fallthru
        _
      %p104 = scmp.lt.s32.totalorder %s11, 4
      // Predicated region
      $region13: #{tpu_custom_call.1} parent=5 // pred_check
        %p105 = pneg %p104
      $region14: #{tpu_custom_call.1} parent=5 // pred_check_branch
        %107 = sbr.rel (%p105) target = $region16
      $region15: #{tpu_custom_call.1} parent=5 // pred_region
        // Predicated region
        $region17: #{tpu_custom_call.1} parent=15 // pred_check
          %p108 = pneg %p31
        $region18: #{tpu_custom_call.1} parent=15 // pred_check_branch
          %110 = sbr.rel (%p108) target = $region20
        $region19: #{tpu_custom_call.1} parent=15 // pred_region
          %s111 = sand.u32 %s21, 1
          %s112 = scalar_lea.sflag [#allocation4], %s111
          %s113 = sand.u32 %s21, 1
          %s114 = smul.addr %s113, 1152
          %s115 = scalar_lea.vmem [#allocation3], %s114
          %s117 = ssub.s32 18432, 18432
          %118 = vsyncadd %s112, %s117
          %s119 = smul.addr %s11, 144
          %s120 = smul.addr %s119, 128
          %s121 = scalar_lea.hbm %s0, %s120
          %s122 = sshll.u32 %s115, 4
          %s123 = int_to_ptr.vmem [resolvable:$true] %s122
          %128 = dma.hbm_to_vmem [thread:$0]  %s121, 18432, %s123, %s112, 384, 384, 24
        $region20: #{tpu_custom_call.1} parent=15 // pred_fallthru
          _
        // Predicated region
        $region21: #{tpu_custom_call.1} parent=15 // pred_check
          %p129 = pneg %p57
        $region22: #{tpu_custom_call.1} parent=15 // pred_check_branch
          %131 = sbr.rel (%p129) target = $region24
        $region23: #{tpu_custom_call.1} parent=15 // pred_region
          %p132 = scmp.lt.s32.totalorder %s11, 3
          %s133 = scalar_select %p132, %s11, 3
          %s134 = smul.addr %s133, 48
          %s135 = smul.addr %s134, 8
          %s136 = scalar_lea.vmem %s1, %s135
        $region24: #{tpu_custom_call.1} parent=15 // pred_fallthru
          _
      $region16: #{tpu_custom_call.1} parent=5 // pred_fallthru
        _
      %p137 = scmp.le.s32.totalorder 1, %s11
      %p138 = scmp.lt.s32.totalorder %s11, 5
      %p139 = pnand %p137, %p138
      %p140 = pneg %p139
      // Predicated region
      $region25: #{tpu_custom_call.1} parent=5 // pred_check
        _
      $region26: #{tpu_custom_call.1} parent=5 // pred_check_branch
        %142 = sbr.rel (%p139) target = $region28
      $region27: #{tpu_custom_call.1} parent=5 // pred_region
        %s143 = ssub.s32 %s11, 1
        %s144 = sand.u32 %s24, 1
        %s145 = scalar_lea.sflag [#allocation4], %s144
        %s146 = sand.u32 %s24, 1
        %s147 = smul.addr %s146, 1152
        %s148 = scalar_lea.vmem [#allocation3], %s147
        // Predicated region
        $region29: #{tpu_custom_call.1} parent=27 // pred_check
          %p149 = pneg %p37
        $region30: #{tpu_custom_call.1} parent=27 // pred_check_branch
          %151 = sbr.rel (%p149) target = $region32
        $region31: #{tpu_custom_call.1} parent=27 // pred_region
          %152 = dma.done %s145, 18432
        $region32: #{tpu_custom_call.1} parent=27 // pred_fallthru
          _
        %s153 = sand.u32 %s24, 1
        %s154 = scalar_lea.sflag [#allocation4], %s153
        %s155 = sand.u32 %s24, 1
        %s156 = smul.addr %s155, 1152
        %s157 = scalar_lea.vmem [#allocation3], %s156
        %p158 = pneg %p37
        %p159 = pneg %p34
        %p160 = scmp.lt.s32.totalorder %s16, 3
        %s161 = scalar_select %p160, %s16, 3
        %s162 = smul.addr %s161, 48
        %s163 = smul.addr %s162, 8
        %s164 = scalar_lea.vmem %s1, %s163
        %p165 = pneg %p63
        %p166 = pneg %p60
        %p167 = pneg %p89
        %p168 = pneg %p86
        %p169 = scmp.lt.s32.totalorder %s16, 3
        %s170 = scalar_select %p169, %s16, 3
        %s171 = smul.addr %s170, 48
        %s172 = smul.addr %s171, 8
        %s173 = scalar_lea.vmem %s2, %s172
        %p174 = scmp.lt.s32.totalorder %s16, 3
        %s175 = scalar_select %p174, %s16, 3
        %s176 = smul.addr %s175, 48
        %s177 = smul.addr %s176, 8
        %s178 = scalar_lea.vmem %s1, %s177
        %p179 = scmp.lt.s32.totalorder %s16, 3
        %s180 = scalar_select %p179, %s16, 3
        %s181 = smul.addr %s180, 48
        %s182 = smul.addr %s181, 8
        %s183 = scalar_lea.vmem %s2, %s182
        %v186 = vld [vmem:[%s178] sm:$0xff]
        %v187 = vld [vmem:[%s178 + $0x8] sm:$0xff]
        %v188 = vld [vmem:[%s178 + $0x10] sm:$0xff]
        %v189 = vld [vmem:[%s178 + $0x18] sm:$0xff]
        %v190 = vld [vmem:[%s178 + $0x20] sm:$0xff]
        %v191 = vld [vmem:[%s178 + $0x28] sm:$0xff]
        %v192 = vld [vmem:[%s178 + $0x30] sm:$0xff]
        %v193 = vld [vmem:[%s178 + $0x38] sm:$0xff]
        %v194 = vld [vmem:[%s178 + $0x40] sm:$0xff]
        %v195 = vld [vmem:[%s178 + $0x48] sm:$0xff]
        %v196 = vld [vmem:[%s178 + $0x50] sm:$0xff]
        %v197 = vld [vmem:[%s178 + $0x58] sm:$0xff]
        %v198 = vld [vmem:[%s178 + $0x60] sm:$0xff]
        %v199 = vld [vmem:[%s178 + $0x68] sm:$0xff]
        %v200 = vld [vmem:[%s178 + $0x70] sm:$0xff]
        %v201 = vld [vmem:[%s178 + $0x78] sm:$0xff]
        %v202 = vld [vmem:[%s178 + $0x80] sm:$0xff]
        %v203 = vld [vmem:[%s178 + $0x88] sm:$0xff]
        %v204 = vld [vmem:[%s178 + $0x90] sm:$0xff]
        %v205 = vld [vmem:[%s178 + $0x98] sm:$0xff]
        %v206 = vld [vmem:[%s178 + $0xa0] sm:$0xff]
        %v207 = vld [vmem:[%s178 + $0xa8] sm:$0xff]
        %v208 = vld [vmem:[%s178 + $0xb0] sm:$0xff]
        %v209 = vld [vmem:[%s178 + $0xb8] sm:$0xff]
        %v210 = vld [vmem:[%s178 + $0xc0] sm:$0xff]
        %v211 = vld [vmem:[%s178 + $0xc8] sm:$0xff]
        %v212 = vld [vmem:[%s178 + $0xd0] sm:$0xff]
        %v213 = vld [vmem:[%s178 + $0xd8] sm:$0xff]
        %v214 = vld [vmem:[%s178 + $0xe0] sm:$0xff]
        %v215 = vld [vmem:[%s178 + $0xe8] sm:$0xff]
        %v216 = vld [vmem:[%s178 + $0xf0] sm:$0xff]
        %v217 = vld [vmem:[%s178 + $0xf8] sm:$0xff]
        %v218 = vld [vmem:[%s178 + $0x100] sm:$0xff]
        %v219 = vld [vmem:[%s178 + $0x108] sm:$0xff]
        %v220 = vld [vmem:[%s178 + $0x110] sm:$0xff]
        %v221 = vld [vmem:[%s178 + $0x118] sm:$0xff]
        %v222 = vld [vmem:[%s178 + $0x120] sm:$0xff]
        %v223 = vld [vmem:[%s178 + $0x128] sm:$0xff]
        %v224 = vld [vmem:[%s178 + $0x130] sm:$0xff]
        %v225 = vld [vmem:[%s178 + $0x138] sm:$0xff]
        %v226 = vld [vmem:[%s178 + $0x140] sm:$0xff]
        %v227 = vld [vmem:[%s178 + $0x148] sm:$0xff]
        %v228 = vld [vmem:[%s178 + $0x150] sm:$0xff]
        %v229 = vld [vmem:[%s178 + $0x158] sm:$0xff]
        %v230 = vld [vmem:[%s178 + $0x160] sm:$0xff]
        %v231 = vld [vmem:[%s178 + $0x168] sm:$0xff]
        %v232 = vld [vmem:[%s178 + $0x170] sm:$0xff]
        %v233 = vld [vmem:[%s178 + $0x178] sm:$0xff]
        %v234 = vpack.c.bf16 %v187, %v186
        %v235 = vpack.c.bf16 %v189, %v188
        %v236 = vpack.c.bf16 %v191, %v190
        %v237 = vpack.c.bf16 %v193, %v192
        %v238 = vpack.c.bf16 %v195, %v194
        %v239 = vpack.c.bf16 %v197, %v196
        %v240 = vpack.c.bf16 %v199, %v198
        %v241 = vpack.c.bf16 %v201, %v200
        %v242 = vpack.c.bf16 %v203, %v202
        %v243 = vpack.c.bf16 %v205, %v204
        %v244 = vpack.c.bf16 %v207, %v206
        %v245 = vpack.c.bf16 %v209, %v208
        %v246 = vpack.c.bf16 %v211, %v210
        %v247 = vpack.c.bf16 %v213, %v212
        %v248 = vpack.c.bf16 %v215, %v214
        %v249 = vpack.c.bf16 %v217, %v216
        %v250 = vpack.c.bf16 %v219, %v218
        %v251 = vpack.c.bf16 %v221, %v220
        %v252 = vpack.c.bf16 %v223, %v222
        %v253 = vpack.c.bf16 %v225, %v224
        %v254 = vpack.c.bf16 %v227, %v226
        %v255 = vpack.c.bf16 %v229, %v228
        %v256 = vpack.c.bf16 %v231, %v230
        %v257 = vpack.c.bf16 %v233, %v232
        %vm258 = vcmask 523264
        %259 = vst.msk [vmem:[#allocation2] sm:$0xff] %vm258, %v234
        %260 = vst.msk [vmem:[#allocation2 + $0x8] sm:$0xff] %vm258, %v235
        %261 = vst.msk [vmem:[#allocation2 + $0x10] sm:$0xff] %vm258, %v236
        %262 = vst.msk [vmem:[#allocation2 + $0x18] sm:$0xff] %vm258, %v237
        %263 = vst.msk [vmem:[#allocation2 + $0x20] sm:$0xff] %vm258, %v238
        %264 = vst.msk [vmem:[#allocation2 + $0x28] sm:$0xff] %vm258, %v239
        %265 = vst.msk [vmem:[#allocation2 + $0x30] sm:$0xff] %vm258, %v240
        %266 = vst.msk [vmem:[#allocation2 + $0x38] sm:$0xff] %vm258, %v241
        %267 = vst.msk [vmem:[#allocation2 + $0x40] sm:$0xff] %vm258, %v242
        %268 = vst.msk [vmem:[#allocation2 + $0x48] sm:$0xff] %vm258, %v243
        %269 = vst.msk [vmem:[#allocation2 + $0x50] sm:$0xff] %vm258, %v244
        %270 = vst.msk [vmem:[#allocation2 + $0x58] sm:$0xff] %vm258, %v245
        %271 = vst.msk [vmem:[#allocation2 + $0x60] sm:$0xff] %vm258, %v246
        %272 = vst.msk [vmem:[#allocation2 + $0x68] sm:$0xff] %vm258, %v247
        %273 = vst.msk [vmem:[#allocation2 + $0x70] sm:$0xff] %vm258, %v248
        %274 = vst.msk [vmem:[#allocation2 + $0x78] sm:$0xff] %vm258, %v249
        %275 = vst.msk [vmem:[#allocation2 + $0x80] sm:$0xff] %vm258, %v250
        %276 = vst.msk [vmem:[#allocation2 + $0x88] sm:$0xff] %vm258, %v251
        %277 = vst.msk [vmem:[#allocation2 + $0x90] sm:$0xff] %vm258, %v252
        %278 = vst.msk [vmem:[#allocation2 + $0x98] sm:$0xff] %vm258, %v253
        %279 = vst.msk [vmem:[#allocation2 + $0xa0] sm:$0xff] %vm258, %v254
        %280 = vst.msk [vmem:[#allocation2 + $0xa8] sm:$0xff] %vm258, %v255
        %281 = vst.msk [vmem:[#allocation2 + $0xb0] sm:$0xff] %vm258, %v256
        %282 = vst.msk [vmem:[#allocation2 + $0xb8] sm:$0xff] %vm258, %v257
        %vm283 = vcmask 1048064
        %284 = vst.msk [vmem:[#allocation2] sm:$0xff] %vm283, 1065369472
        %285 = vst.msk [vmem:[#allocation2 + $0x8] sm:$0xff] %vm283, 1065369472
        %286 = vst.msk [vmem:[#allocation2 + $0x10] sm:$0xff] %vm283, 1065369472
        %287 = vst.msk [vmem:[#allocation2 + $0x18] sm:$0xff] %vm283, 1065369472
        %288 = vst.msk [vmem:[#allocation2 + $0x20] sm:$0xff] %vm283, 1065369472
        %289 = vst.msk [vmem:[#allocation2 + $0x28] sm:$0xff] %vm283, 1065369472
        %290 = vst.msk [vmem:[#allocation2 + $0x30] sm:$0xff] %vm283, 1065369472
        %291 = vst.msk [vmem:[#allocation2 + $0x38] sm:$0xff] %vm283, 1065369472
        %292 = vst.msk [vmem:[#allocation2 + $0x40] sm:$0xff] %vm283, 1065369472
        %293 = vst.msk [vmem:[#allocation2 + $0x48] sm:$0xff] %vm283, 1065369472
        %294 = vst.msk [vmem:[#allocation2 + $0x50] sm:$0xff] %vm283, 1065369472
        %295 = vst.msk [vmem:[#allocation2 + $0x58] sm:$0xff] %vm283, 1065369472
        %296 = vst.msk [vmem:[#allocation2 + $0x60] sm:$0xff] %vm283, 1065369472
        %297 = vst.msk [vmem:[#allocation2 + $0x68] sm:$0xff] %vm283, 1065369472
        %298 = vst.msk [vmem:[#allocation2 + $0x70] sm:$0xff] %vm283, 1065369472
        %299 = vst.msk [vmem:[#allocation2 + $0x78] sm:$0xff] %vm283, 1065369472
        %300 = vst.msk [vmem:[#allocation2 + $0x80] sm:$0xff] %vm283, 1065369472
        %301 = vst.msk [vmem:[#allocation2 + $0x88] sm:$0xff] %vm283, 1065369472
        %302 = vst.msk [vmem:[#allocation2 + $0x90] sm:$0xff] %vm283, 1065369472
        %303 = vst.msk [vmem:[#allocation2 + $0x98] sm:$0xff] %vm283, 1065369472
        %304 = vst.msk [vmem:[#allocation2 + $0xa0] sm:$0xff] %vm283, 1065369472
        %305 = vst.msk [vmem:[#allocation2 + $0xa8] sm:$0xff] %vm283, 1065369472
        %306 = vst.msk [vmem:[#allocation2 + $0xb0] sm:$0xff] %vm283, 1065369472
        %307 = vst.msk [vmem:[#allocation2 + $0xb8] sm:$0xff] %vm283, 1065369472
        %v308 = vld [vmem:[%s148] sm:$0xff]
        %v309 = vld [vmem:[%s148 + $0x8] sm:$0xff]
        %v310 = vld [vmem:[%s148 + $0x10] sm:$0xff]
        %v311 = vld [vmem:[%s148 + $0x18] sm:$0xff]
        %v312 = vld [vmem:[%s148 + $0x20] sm:$0xff]
        %v313 = vld [vmem:[%s148 + $0x28] sm:$0xff]
        %v314 = vld [vmem:[%s148 + $0x30] sm:$0xff]
        %v315 = vld [vmem:[%s148 + $0x38] sm:$0xff]
        %v316 = vld [vmem:[%s148 + $0x40] sm:$0xff]
        %v317 = vld [vmem:[%s148 + $0x48] sm:$0xff]
        %v318 = vld [vmem:[%s148 + $0x50] sm:$0xff]
        %v319 = vld [vmem:[%s148 + $0x58] sm:$0xff]
        %v320 = vld [vmem:[%s148 + $0x60] sm:$0xff]
        %v321 = vld [vmem:[%s148 + $0x68] sm:$0xff]
        %v322 = vld [vmem:[%s148 + $0x70] sm:$0xff]
        %v323 = vld [vmem:[%s148 + $0x78] sm:$0xff]
        %v324 = vld [vmem:[%s148 + $0x80] sm:$0xff]
        %v325 = vld [vmem:[%s148 + $0x88] sm:$0xff]
        %v326 = vld [vmem:[%s148 + $0x90] sm:$0xff]
        %v327 = vld [vmem:[%s148 + $0x98] sm:$0xff]
        %v328 = vld [vmem:[%s148 + $0xa0] sm:$0xff]
        %v329 = vld [vmem:[%s148 + $0xa8] sm:$0xff]
        %v330 = vld [vmem:[%s148 + $0xb0] sm:$0xff]
        %v331 = vld [vmem:[%s148 + $0xb8] sm:$0xff]
        %v332 = vld [vmem:[%s148 + $0xc0] sm:$0xff]
        %v333 = vld [vmem:[%s148 + $0xc8] sm:$0xff]
        %v334 = vld [vmem:[%s148 + $0xd0] sm:$0xff]
        %v335 = vld [vmem:[%s148 + $0xd8] sm:$0xff]
        %v336 = vld [vmem:[%s148 + $0xe0] sm:$0xff]
        %v337 = vld [vmem:[%s148 + $0xe8] sm:$0xff]
        %v338 = vld [vmem:[%s148 + $0xf0] sm:$0xff]
        %v339 = vld [vmem:[%s148 + $0xf8] sm:$0xff]
        %v340 = vld [vmem:[%s148 + $0x100] sm:$0xff]
        %v341 = vld [vmem:[%s148 + $0x108] sm:$0xff]
        %v342 = vld [vmem:[%s148 + $0x110] sm:$0xff]
        %v343 = vld [vmem:[%s148 + $0x118] sm:$0xff]
        %v344 = vld [vmem:[%s148 + $0x120] sm:$0xff]
        %v345 = vld [vmem:[%s148 + $0x128] sm:$0xff]
        %v346 = vld [vmem:[%s148 + $0x130] sm:$0xff]
        %v347 = vld [vmem:[%s148 + $0x138] sm:$0xff]
        %v348 = vld [vmem:[%s148 + $0x140] sm:$0xff]
        %v349 = vld [vmem:[%s148 + $0x148] sm:$0xff]
        %v350 = vld [vmem:[%s148 + $0x150] sm:$0xff]
        %v351 = vld [vmem:[%s148 + $0x158] sm:$0xff]
        %v352 = vld [vmem:[%s148 + $0x160] sm:$0xff]
        %v353 = vld [vmem:[%s148 + $0x168] sm:$0xff]
        %v354 = vld [vmem:[%s148 + $0x170] sm:$0xff]
        %v355 = vld [vmem:[%s148 + $0x178] sm:$0xff]
        %v356 = vld [vmem:[%s148 + $0x180] sm:$0xff]
        %v357 = vld [vmem:[%s148 + $0x188] sm:$0xff]
        %v358 = vld [vmem:[%s148 + $0x190] sm:$0xff]
        %v359 = vld [vmem:[%s148 + $0x198] sm:$0xff]
        %v360 = vld [vmem:[%s148 + $0x1a0] sm:$0xff]
        %v361 = vld [vmem:[%s148 + $0x1a8] sm:$0xff]
        %v362 = vld [vmem:[%s148 + $0x1b0] sm:$0xff]
        %v363 = vld [vmem:[%s148 + $0x1b8] sm:$0xff]
        %v364 = vld [vmem:[%s148 + $0x1c0] sm:$0xff]
        %v365 = vld [vmem:[%s148 + $0x1c8] sm:$0xff]
        %v366 = vld [vmem:[%s148 + $0x1d0] sm:$0xff]
        %v367 = vld [vmem:[%s148 + $0x1d8] sm:$0xff]
        %v368 = vld [vmem:[%s148 + $0x1e0] sm:$0xff]
        %v369 = vld [vmem:[%s148 + $0x1e8] sm:$0xff]
        %v370 = vld [vmem:[%s148 + $0x1f0] sm:$0xff]
        %v371 = vld [vmem:[%s148 + $0x1f8] sm:$0xff]
        %v372 = vld [vmem:[%s148 + $0x200] sm:$0xff]
        %v373 = vld [vmem:[%s148 + $0x208] sm:$0xff]
        %v374 = vld [vmem:[%s148 + $0x210] sm:$0xff]
        %v375 = vld [vmem:[%s148 + $0x218] sm:$0xff]
        %v376 = vld [vmem:[%s148 + $0x220] sm:$0xff]
        %v377 = vld [vmem:[%s148 + $0x228] sm:$0xff]
        %v378 = vld [vmem:[%s148 + $0x230] sm:$0xff]
        %v379 = vld [vmem:[%s148 + $0x238] sm:$0xff]
        %v380 = vld [vmem:[%s148 + $0x240] sm:$0xff]
        %v381 = vld [vmem:[%s148 + $0x248] sm:$0xff]
        %v382 = vld [vmem:[%s148 + $0x250] sm:$0xff]
        %v383 = vld [vmem:[%s148 + $0x258] sm:$0xff]
        %v384 = vld [vmem:[%s148 + $0x260] sm:$0xff]
        %v385 = vld [vmem:[%s148 + $0x268] sm:$0xff]
        %v386 = vld [vmem:[%s148 + $0x270] sm:$0xff]
        %v387 = vld [vmem:[%s148 + $0x278] sm:$0xff]
        %v388 = vld [vmem:[%s148 + $0x280] sm:$0xff]
        %v389 = vld [vmem:[%s148 + $0x288] sm:$0xff]
        %v390 = vld [vmem:[%s148 + $0x290] sm:$0xff]
        %v391 = vld [vmem:[%s148 + $0x298] sm:$0xff]
        %v392 = vld [vmem:[%s148 + $0x2a0] sm:$0xff]
        %v393 = vld [vmem:[%s148 + $0x2a8] sm:$0xff]
        %v394 = vld [vmem:[%s148 + $0x2b0] sm:$0xff]
        %v395 = vld [vmem:[%s148 + $0x2b8] sm:$0xff]
        %v396 = vld [vmem:[%s148 + $0x2c0] sm:$0xff]
        %v397 = vld [vmem:[%s148 + $0x2c8] sm:$0xff]
        %v398 = vld [vmem:[%s148 + $0x2d0] sm:$0xff]
        %v399 = vld [vmem:[%s148 + $0x2d8] sm:$0xff]
        %v400 = vld [vmem:[%s148 + $0x2e0] sm:$0xff]
        %v401 = vld [vmem:[%s148 + $0x2e8] sm:$0xff]
        %v402 = vld [vmem:[%s148 + $0x2f0] sm:$0xff]
        %v403 = vld [vmem:[%s148 + $0x2f8] sm:$0xff]
        %v404 = vld [vmem:[%s148 + $0x300] sm:$0xff]
        %v405 = vld [vmem:[%s148 + $0x308] sm:$0xff]
        %v406 = vld [vmem:[%s148 + $0x310] sm:$0xff]
        %v407 = vld [vmem:[%s148 + $0x318] sm:$0xff]
        %v408 = vld [vmem:[%s148 + $0x320] sm:$0xff]
        %v409 = vld [vmem:[%s148 + $0x328] sm:$0xff]
        %v410 = vld [vmem:[%s148 + $0x330] sm:$0xff]
        %v411 = vld [vmem:[%s148 + $0x338] sm:$0xff]
        %v412 = vld [vmem:[%s148 + $0x340] sm:$0xff]
        %v413 = vld [vmem:[%s148 + $0x348] sm:$0xff]
        %v414 = vld [vmem:[%s148 + $0x350] sm:$0xff]
        %v415 = vld [vmem:[%s148 + $0x358] sm:$0xff]
        %v416 = vld [vmem:[%s148 + $0x360] sm:$0xff]
        %v417 = vld [vmem:[%s148 + $0x368] sm:$0xff]
        %v418 = vld [vmem:[%s148 + $0x370] sm:$0xff]
        %v419 = vld [vmem:[%s148 + $0x378] sm:$0xff]
        %v420 = vld [vmem:[%s148 + $0x380] sm:$0xff]
        %v421 = vld [vmem:[%s148 + $0x388] sm:$0xff]
        %v422 = vld [vmem:[%s148 + $0x390] sm:$0xff]
        %v423 = vld [vmem:[%s148 + $0x398] sm:$0xff]
        %v424 = vld [vmem:[%s148 + $0x3a0] sm:$0xff]
        %v425 = vld [vmem:[%s148 + $0x3a8] sm:$0xff]
        %v426 = vld [vmem:[%s148 + $0x3b0] sm:$0xff]
        %v427 = vld [vmem:[%s148 + $0x3b8] sm:$0xff]
        %v428 = vld [vmem:[%s148 + $0x3c0] sm:$0xff]
        %v429 = vld [vmem:[%s148 + $0x3c8] sm:$0xff]
        %v430 = vld [vmem:[%s148 + $0x3d0] sm:$0xff]
        %v431 = vld [vmem:[%s148 + $0x3d8] sm:$0xff]
        %v432 = vld [vmem:[%s148 + $0x3e0] sm:$0xff]
        %v433 = vld [vmem:[%s148 + $0x3e8] sm:$0xff]
        %v434 = vld [vmem:[%s148 + $0x3f0] sm:$0xff]
        %v435 = vld [vmem:[%s148 + $0x3f8] sm:$0xff]
        %v436 = vld [vmem:[%s148 + $0x400] sm:$0xff]
        %v437 = vld [vmem:[%s148 + $0x408] sm:$0xff]
        %v438 = vld [vmem:[%s148 + $0x410] sm:$0xff]
        %v439 = vld [vmem:[%s148 + $0x418] sm:$0xff]
        %v440 = vld [vmem:[%s148 + $0x420] sm:$0xff]
        %v441 = vld [vmem:[%s148 + $0x428] sm:$0xff]
        %v442 = vld [vmem:[%s148 + $0x430] sm:$0xff]
        %v443 = vld [vmem:[%s148 + $0x438] sm:$0xff]
        %v444 = vld [vmem:[%s148 + $0x440] sm:$0xff]
        %v445 = vld [vmem:[%s148 + $0x448] sm:$0xff]
        %v446 = vld [vmem:[%s148 + $0x450] sm:$0xff]
        %v447 = vld [vmem:[%s148 + $0x458] sm:$0xff]
        %v448 = vld [vmem:[%s148 + $0x460] sm:$0xff]
        %v449 = vld [vmem:[%s148 + $0x468] sm:$0xff]
        %v450 = vld [vmem:[%s148 + $0x470] sm:$0xff]
        %v451 = vld [vmem:[%s148 + $0x478] sm:$0xff]
        %v452 = vmax.f32 %v308, %v309
        %v453 = vmax.f32 %v452, %v310
        %454 = vmax.xlane.f32.xlu0 %v453
        %v455 = vpop.xlane.xlu0 %454
        %v456 = vmax.f32 %v311, %v312
        %v457 = vmax.f32 %v456, %v313
        %458 = vmax.xlane.f32.xlu0 %v457
        %v459 = vpop.xlane.xlu0 %458
        %v460 = vmax.f32 %v314, %v315
        %v461 = vmax.f32 %v460, %v316
        %462 = vmax.xlane.f32.xlu0 %v461
        %v463 = vpop.xlane.xlu0 %462
        %v464 = vmax.f32 %v317, %v318
        %v465 = vmax.f32 %v464, %v319
        %466 = vmax.xlane.f32.xlu0 %v465
        %v467 = vpop.xlane.xlu0 %466
        %v468 = vmax.f32 %v320, %v321
        %v469 = vmax.f32 %v468, %v322
        %470 = vmax.xlane.f32.xlu0 %v469
        %v471 = vpop.xlane.xlu0 %470
        %v472 = vmax.f32 %v323, %v324
        %v473 = vmax.f32 %v472, %v325
        %474 = vmax.xlane.f32.xlu0 %v473
        %v475 = vpop.xlane.xlu0 %474
        %v476 = vmax.f32 %v326, %v327
        %v477 = vmax.f32 %v476, %v328
        %478 = vmax.xlane.f32.xlu0 %v477
        %v479 = vpop.xlane.xlu0 %478
        %v480 = vmax.f32 %v329, %v330
        %v481 = vmax.f32 %v480, %v331
        %482 = vmax.xlane.f32.xlu0 %v481
        %v483 = vpop.xlane.xlu0 %482
        %v484 = vmax.f32 %v332, %v333
        %v485 = vmax.f32 %v484, %v334
        %486 = vmax.xlane.f32.xlu0 %v485
        %v487 = vpop.xlane.xlu0 %486
        %v488 = vmax.f32 %v335, %v336
        %v489 = vmax.f32 %v488, %v337
        %490 = vmax.xlane.f32.xlu0 %v489
        %v491 = vpop.xlane.xlu0 %490
        %v492 = vmax.f32 %v338, %v339
        %v493 = vmax.f32 %v492, %v340
        %494 = vmax.xlane.f32.xlu0 %v493
        %v495 = vpop.xlane.xlu0 %494
        %v496 = vmax.f32 %v341, %v342
        %v497 = vmax.f32 %v496, %v343
        %498 = vmax.xlane.f32.xlu0 %v497
        %v499 = vpop.xlane.xlu0 %498
        %v500 = vmax.f32 %v344, %v345
        %v501 = vmax.f32 %v500, %v346
        %502 = vmax.xlane.f32.xlu0 %v501
        %v503 = vpop.xlane.xlu0 %502
        %v504 = vmax.f32 %v347, %v348
        %v505 = vmax.f32 %v504, %v349
        %506 = vmax.xlane.f32.xlu0 %v505
        %v507 = vpop.xlane.xlu0 %506
        %v508 = vmax.f32 %v350, %v351
        %v509 = vmax.f32 %v508, %v352
        %510 = vmax.xlane.f32.xlu0 %v509
        %v511 = vpop.xlane.xlu0 %510
        %v512 = vmax.f32 %v353, %v354
        %v513 = vmax.f32 %v512, %v355
        %514 = vmax.xlane.f32.xlu0 %v513
        %v515 = vpop.xlane.xlu0 %514
        %v516 = vmax.f32 %v356, %v357
        %v517 = vmax.f32 %v516, %v358
        %518 = vmax.xlane.f32.xlu0 %v517
        %v519 = vpop.xlane.xlu0 %518
        %v520 = vmax.f32 %v359, %v360
        %v521 = vmax.f32 %v520, %v361
        %522 = vmax.xlane.f32.xlu0 %v521
        %v523 = vpop.xlane.xlu0 %522
        %v524 = vmax.f32 %v362, %v363
        %v525 = vmax.f32 %v524, %v364
        %526 = vmax.xlane.f32.xlu0 %v525
        %v527 = vpop.xlane.xlu0 %526
        %v528 = vmax.f32 %v365, %v366
        %v529 = vmax.f32 %v528, %v367
        %530 = vmax.xlane.f32.xlu0 %v529
        %v531 = vpop.xlane.xlu0 %530
        %v532 = vmax.f32 %v368, %v369
        %v533 = vmax.f32 %v532, %v370
        %534 = vmax.xlane.f32.xlu0 %v533
        %v535 = vpop.xlane.xlu0 %534
        %v536 = vmax.f32 %v371, %v372
        %v537 = vmax.f32 %v536, %v373
        %538 = vmax.xlane.f32.xlu0 %v537
        %v539 = vpop.xlane.xlu0 %538
        %v540 = vmax.f32 %v374, %v375
        %v541 = vmax.f32 %v540, %v376
        %542 = vmax.xlane.f32.xlu0 %v541
        %v543 = vpop.xlane.xlu0 %542
        %v544 = vmax.f32 %v377, %v378
        %v545 = vmax.f32 %v544, %v379
        %546 = vmax.xlane.f32.xlu0 %v545
        %v547 = vpop.xlane.xlu0 %546
        %v548 = vmax.f32 %v380, %v381
        %v549 = vmax.f32 %v548, %v382
        %550 = vmax.xlane.f32.xlu0 %v549
        %v551 = vpop.xlane.xlu0 %550
        %v552 = vmax.f32 %v383, %v384
        %v553 = vmax.f32 %v552, %v385
        %554 = vmax.xlane.f32.xlu0 %v553
        %v555 = vpop.xlane.xlu0 %554
        %v556 = vmax.f32 %v386, %v387
        %v557 = vmax.f32 %v556, %v388
        %558 = vmax.xlane.f32.xlu0 %v557
        %v559 = vpop.xlane.xlu0 %558
        %v560 = vmax.f32 %v389, %v390
        %v561 = vmax.f32 %v560, %v391
        %562 = vmax.xlane.f32.xlu0 %v561
        %v563 = vpop.xlane.xlu0 %562
        %v564 = vmax.f32 %v392, %v393
        %v565 = vmax.f32 %v564, %v394
        %566 = vmax.xlane.f32.xlu0 %v565
        %v567 = vpop.xlane.xlu0 %566
        %v568 = vmax.f32 %v395, %v396
        %v569 = vmax.f32 %v568, %v397
        %570 = vmax.xlane.f32.xlu0 %v569
        %v571 = vpop.xlane.xlu0 %570
        %v572 = vmax.f32 %v398, %v399
        %v573 = vmax.f32 %v572, %v400
        %574 = vmax.xlane.f32.xlu0 %v573
        %v575 = vpop.xlane.xlu0 %574
        %v576 = vmax.f32 %v401, %v402
        %v577 = vmax.f32 %v576, %v403
        %578 = vmax.xlane.f32.xlu0 %v577
        %v579 = vpop.xlane.xlu0 %578
        %v580 = vmax.f32 %v404, %v405
        %v581 = vmax.f32 %v580, %v406
        %582 = vmax.xlane.f32.xlu0 %v581
        %v583 = vpop.xlane.xlu0 %582
        %v584 = vmax.f32 %v407, %v408
        %v585 = vmax.f32 %v584, %v409
        %586 = vmax.xlane.f32.xlu0 %v585
        %v587 = vpop.xlane.xlu0 %586
        %v588 = vmax.f32 %v410, %v411
        %v589 = vmax.f32 %v588, %v412
        %590 = vmax.xlane.f32.xlu0 %v589
        %v591 = vpop.xlane.xlu0 %590
        %v592 = vmax.f32 %v413, %v414
        %v593 = vmax.f32 %v592, %v415
        %594 = vmax.xlane.f32.xlu0 %v593
        %v595 = vpop.xlane.xlu0 %594
        %v596 = vmax.f32 %v416, %v417
        %v597 = vmax.f32 %v596, %v418
        %598 = vmax.xlane.f32.xlu0 %v597
        %v599 = vpop.xlane.xlu0 %598
        %v600 = vmax.f32 %v419, %v420
        %v601 = vmax.f32 %v600, %v421
        %602 = vmax.xlane.f32.xlu0 %v601
        %v603 = vpop.xlane.xlu0 %602
        %v604 = vmax.f32 %v422, %v423
        %v605 = vmax.f32 %v604, %v424
        %606 = vmax.xlane.f32.xlu0 %v605
        %v607 = vpop.xlane.xlu0 %606
        %v608 = vmax.f32 %v425, %v426
        %v609 = vmax.f32 %v608, %v427
        %610 = vmax.xlane.f32.xlu0 %v609
        %v611 = vpop.xlane.xlu0 %610
        %v612 = vmax.f32 %v428, %v429
        %v613 = vmax.f32 %v612, %v430
        %614 = vmax.xlane.f32.xlu0 %v613
        %v615 = vpop.xlane.xlu0 %614
        %v616 = vmax.f32 %v431, %v432
        %v617 = vmax.f32 %v616, %v433
        %618 = vmax.xlane.f32.xlu0 %v617
        %v619 = vpop.xlane.xlu0 %618
        %v620 = vmax.f32 %v434, %v435
        %v621 = vmax.f32 %v620, %v436
        %622 = vmax.xlane.f32.xlu0 %v621
        %v623 = vpop.xlane.xlu0 %622
        %v624 = vmax.f32 %v437, %v438
        %v625 = vmax.f32 %v624, %v439
        %626 = vmax.xlane.f32.xlu0 %v625
        %v627 = vpop.xlane.xlu0 %626
        %v628 = vmax.f32 %v440, %v441
        %v629 = vmax.f32 %v628, %v442
        %630 = vmax.xlane.f32.xlu0 %v629
        %v631 = vpop.xlane.xlu0 %630
        %v632 = vmax.f32 %v443, %v444
        %v633 = vmax.f32 %v632, %v445
        %634 = vmax.xlane.f32.xlu0 %v633
        %v635 = vpop.xlane.xlu0 %634
        %v636 = vmax.f32 %v446, %v447
        %v637 = vmax.f32 %v636, %v448
        %638 = vmax.xlane.f32.xlu0 %v637
        %v639 = vpop.xlane.xlu0 %638
        %v640 = vmax.f32 %v449, %v450
        %v641 = vmax.f32 %v640, %v451
        %642 = vmax.xlane.f32.xlu0 %v641
        %v643 = vpop.xlane.xlu0 %642
        %v644 = vsub.f32 %v308, %v455
        %v645 = vsub.f32 %v309, %v455
        %v646 = vsub.f32 %v310, %v455
        %v647 = vsub.f32 %v311, %v459
        %v648 = vsub.f32 %v312, %v459
        %v649 = vsub.f32 %v313, %v459
        %v650 = vsub.f32 %v314, %v463
        %v651 = vsub.f32 %v315, %v463
        %v652 = vsub.f32 %v316, %v463
        %v653 = vsub.f32 %v317, %v467
        %v654 = vsub.f32 %v318, %v467
        %v655 = vsub.f32 %v319, %v467
        %v656 = vsub.f32 %v320, %v471
        %v657 = vsub.f32 %v321, %v471
        %v658 = vsub.f32 %v322, %v471
        %v659 = vsub.f32 %v323, %v475
        %v660 = vsub.f32 %v324, %v475
        %v661 = vsub.f32 %v325, %v475
        %v662 = vsub.f32 %v326, %v479
        %v663 = vsub.f32 %v327, %v479
        %v664 = vsub.f32 %v328, %v479
        %v665 = vsub.f32 %v329, %v483
        %v666 = vsub.f32 %v330, %v483
        %v667 = vsub.f32 %v331, %v483
        %v668 = vsub.f32 %v332, %v487
        %v669 = vsub.f32 %v333, %v487
        %v670 = vsub.f32 %v334, %v487
        %v671 = vsub.f32 %v335, %v491
        %v672 = vsub.f32 %v336, %v491
        %v673 = vsub.f32 %v337, %v491
        %v674 = vsub.f32 %v338, %v495
        %v675 = vsub.f32 %v339, %v495
        %v676 = vsub.f32 %v340, %v495
        %v677 = vsub.f32 %v341, %v499
        %v678 = vsub.f32 %v342, %v499
        %v679 = vsub.f32 %v343, %v499
        %v680 = vsub.f32 %v344, %v503
        %v681 = vsub.f32 %v345, %v503
        %v682 = vsub.f32 %v346, %v503
        %v683 = vsub.f32 %v347, %v507
        %v684 = vsub.f32 %v348, %v507
        %v685 = vsub.f32 %v349, %v507
        %v686 = vsub.f32 %v350, %v511
        %v687 = vsub.f32 %v351, %v511
        %v688 = vsub.f32 %v352, %v511
        %v689 = vsub.f32 %v353, %v515
        %v690 = vsub.f32 %v354, %v515
        %v691 = vsub.f32 %v355, %v515
        %v692 = vsub.f32 %v356, %v519
        %v693 = vsub.f32 %v357, %v519
        %v694 = vsub.f32 %v358, %v519
        %v695 = vsub.f32 %v359, %v523
        %v696 = vsub.f32 %v360, %v523
        %v697 = vsub.f32 %v361, %v523
        %v698 = vsub.f32 %v362, %v527
        %v699 = vsub.f32 %v363, %v527
        %v700 = vsub.f32 %v364, %v527
        %v701 = vsub.f32 %v365, %v531
        %v702 = vsub.f32 %v366, %v531
        %v703 = vsub.f32 %v367, %v531
        %v704 = vsub.f32 %v368, %v535
        %v705 = vsub.f32 %v369, %v535
        %v706 = vsub.f32 %v370, %v535
        %v707 = vsub.f32 %v371, %v539
        %v708 = vsub.f32 %v372, %v539
        %v709 = vsub.f32 %v373, %v539
        %v710 = vsub.f32 %v374, %v543
        %v711 = vsub.f32 %v375, %v543
        %v712 = vsub.f32 %v376, %v543
        %v713 = vsub.f32 %v377, %v547
        %v714 = vsub.f32 %v378, %v547
        %v715 = vsub.f32 %v379, %v547
        %v716 = vsub.f32 %v380, %v551
        %v717 = vsub.f32 %v381, %v551
        %v718 = vsub.f32 %v382, %v551
        %v719 = vsub.f32 %v383, %v555
        %v720 = vsub.f32 %v384, %v555
        %v721 = vsub.f32 %v385, %v555
        %v722 = vsub.f32 %v386, %v559
        %v723 = vsub.f32 %v387, %v559
        %v724 = vsub.f32 %v388, %v559
        %v725 = vsub.f32 %v389, %v563
        %v726 = vsub.f32 %v390, %v563
        %v727 = vsub.f32 %v391, %v563
        %v728 = vsub.f32 %v392, %v567
        %v729 = vsub.f32 %v393, %v567
        %v730 = vsub.f32 %v394, %v567
        %v731 = vsub.f32 %v395, %v571
        %v732 = vsub.f32 %v396, %v571
        %v733 = vsub.f32 %v397, %v571
        %v734 = vsub.f32 %v398, %v575
        %v735 = vsub.f32 %v399, %v575
        %v736 = vsub.f32 %v400, %v575
        %v737 = vsub.f32 %v401, %v579
        %v738 = vsub.f32 %v402, %v579
        %v739 = vsub.f32 %v403, %v579
        %v740 = vsub.f32 %v404, %v583
        %v741 = vsub.f32 %v405, %v583
        %v742 = vsub.f32 %v406, %v583
        %v743 = vsub.f32 %v407, %v587
        %v744 = vsub.f32 %v408, %v587
        %v745 = vsub.f32 %v409, %v587
        %v746 = vsub.f32 %v410, %v591
        %v747 = vsub.f32 %v411, %v591
        %v748 = vsub.f32 %v412, %v591
        %v749 = vsub.f32 %v413, %v595
        %v750 = vsub.f32 %v414, %v595
        %v751 = vsub.f32 %v415, %v595
        %v752 = vsub.f32 %v416, %v599
        %v753 = vsub.f32 %v417, %v599
        %v754 = vsub.f32 %v418, %v599
        %v755 = vsub.f32 %v419, %v603
        %v756 = vsub.f32 %v420, %v603
        %v757 = vsub.f32 %v421, %v603
        %v758 = vsub.f32 %v422, %v607
        %v759 = vsub.f32 %v423, %v607
        %v760 = vsub.f32 %v424, %v607
        %v761 = vsub.f32 %v425, %v611
        %v762 = vsub.f32 %v426, %v611
        %v763 = vsub.f32 %v427, %v611
        %v764 = vsub.f32 %v428, %v615
        %v765 = vsub.f32 %v429, %v615
        %v766 = vsub.f32 %v430, %v615
        %v767 = vsub.f32 %v431, %v619
        %v768 = vsub.f32 %v432, %v619
        %v769 = vsub.f32 %v433, %v619
        %v770 = vsub.f32 %v434, %v623
        %v771 = vsub.f32 %v435, %v623
        %v772 = vsub.f32 %v436, %v623
        %v773 = vsub.f32 %v437, %v627
        %v774 = vsub.f32 %v438, %v627
        %v775 = vsub.f32 %v439, %v627
        %v776 = vsub.f32 %v440, %v631
        %v777 = vsub.f32 %v441, %v631
        %v778 = vsub.f32 %v442, %v631
        %v779 = vsub.f32 %v443, %v635
        %v780 = vsub.f32 %v444, %v635
        %v781 = vsub.f32 %v445, %v635
        %v782 = vsub.f32 %v446, %v639
        %v783 = vsub.f32 %v447, %v639
        %v784 = vsub.f32 %v448, %v639
        %v785 = vsub.f32 %v449, %v643
        %v786 = vsub.f32 %v450, %v643
        %v787 = vsub.f32 %v451, %v643
        %v788 = vmul.f32 %v644, 1.442695
        %v789 = vpow.pop %v788
        %v790 = vmul.f32 %v645, 1.442695
        %v791 = vpow.pop %v790
        %v792 = vmul.f32 %v646, 1.442695
        %v793 = vpow.pop %v792
        %v794 = vmul.f32 %v647, 1.442695
        %v795 = vpow.pop %v794
        %v796 = vmul.f32 %v648, 1.442695
        %v797 = vpow.pop %v796
        %v798 = vmul.f32 %v649, 1.442695
        %v799 = vpow.pop %v798
        %v800 = vmul.f32 %v650, 1.442695
        %v801 = vpow.pop %v800
        %v802 = vmul.f32 %v651, 1.442695
        %v803 = vpow.pop %v802
        %v804 = vmul.f32 %v652, 1.442695
        %v805 = vpow.pop %v804
        %v806 = vmul.f32 %v653, 1.442695
        %v807 = vpow.pop %v806
        %v808 = vmul.f32 %v654, 1.442695
        %v809 = vpow.pop %v808
        %v810 = vmul.f32 %v655, 1.442695
        %v811 = vpow.pop %v810
        %v812 = vmul.f32 %v656, 1.442695
        %v813 = vpow.pop %v812
        %v814 = vmul.f32 %v657, 1.442695
        %v815 = vpow.pop %v814
        %v816 = vmul.f32 %v658, 1.442695
        %v817 = vpow.pop %v816
        %v818 = vmul.f32 %v659, 1.442695
        %v819 = vpow.pop %v818
        %v820 = vmul.f32 %v660, 1.442695
        %v821 = vpow.pop %v820
        %v822 = vmul.f32 %v661, 1.442695
        %v823 = vpow.pop %v822
        %v824 = vmul.f32 %v662, 1.442695
        %v825 = vpow.pop %v824
        %v826 = vmul.f32 %v663, 1.442695
        %v827 = vpow.pop %v826
        %v828 = vmul.f32 %v664, 1.442695
        %v829 = vpow.pop %v828
        %v830 = vmul.f32 %v665, 1.442695
        %v831 = vpow.pop %v830
        %v832 = vmul.f32 %v666, 1.442695
        %v833 = vpow.pop %v832
        %v834 = vmul.f32 %v667, 1.442695
        %v835 = vpow.pop %v834
        %v836 = vmul.f32 %v668, 1.442695
        %v837 = vpow.pop %v836
        %v838 = vmul.f32 %v669, 1.442695
        %v839 = vpow.pop %v838
        %v840 = vmul.f32 %v670, 1.442695
        %v841 = vpow.pop %v840
        %v842 = vmul.f32 %v671, 1.442695
        %v843 = vpow.pop %v842
        %v844 = vmul.f32 %v672, 1.442695
        %v845 = vpow.pop %v844
        %v846 = vmul.f32 %v673, 1.442695
        %v847 = vpow.pop %v846
        %v848 = vmul.f32 %v674, 1.442695
        %v849 = vpow.pop %v848
        %v850 = vmul.f32 %v675, 1.442695
        %v851 = vpow.pop %v850
        %v852 = vmul.f32 %v676, 1.442695
        %v853 = vpow.pop %v852
        %v854 = vmul.f32 %v677, 1.442695
        %v855 = vpow.pop %v854
        %v856 = vmul.f32 %v678, 1.442695
        %v857 = vpow.pop %v856
        %v858 = vmul.f32 %v679, 1.442695
        %v859 = vpow.pop %v858
        %v860 = vmul.f32 %v680, 1.442695
        %v861 = vpow.pop %v860
        %v862 = vmul.f32 %v681, 1.442695
        %v863 = vpow.pop %v862
        %v864 = vmul.f32 %v682, 1.442695
        %v865 = vpow.pop %v864
        %v866 = vmul.f32 %v683, 1.442695
        %v867 = vpow.pop %v866
        %v868 = vmul.f32 %v684, 1.442695
        %v869 = vpow.pop %v868
        %v870 = vmul.f32 %v685, 1.442695
        %v871 = vpow.pop %v870
        %v872 = vmul.f32 %v686, 1.442695
        %v873 = vpow.pop %v872
        %v874 = vmul.f32 %v687, 1.442695
        %v875 = vpow.pop %v874
        %v876 = vmul.f32 %v688, 1.442695
        %v877 = vpow.pop %v876
        %v878 = vmul.f32 %v689, 1.442695
        %v879 = vpow.pop %v878
        %v880 = vmul.f32 %v690, 1.442695
        %v881 = vpow.pop %v880
        %v882 = vmul.f32 %v691, 1.442695
        %v883 = vpow.pop %v882
        %v884 = vmul.f32 %v692, 1.442695
        %v885 = vpow.pop %v884
        %v886 = vmul.f32 %v693, 1.442695
        %v887 = vpow.pop %v886
        %v888 = vmul.f32 %v694, 1.442695
        %v889 = vpow.pop %v888
        %v890 = vmul.f32 %v695, 1.442695
        %v891 = vpow.pop %v890
        %v892 = vmul.f32 %v696, 1.442695
        %v893 = vpow.pop %v892
        %v894 = vmul.f32 %v697, 1.442695
        %v895 = vpow.pop %v894
        %v896 = vmul.f32 %v698, 1.442695
        %v897 = vpow.pop %v896
        %v898 = vmul.f32 %v699, 1.442695
        %v899 = vpow.pop %v898
        %v900 = vmul.f32 %v700, 1.442695
        %v901 = vpow.pop %v900
        %v902 = vmul.f32 %v701, 1.442695
        %v903 = vpow.pop %v902
        %v904 = vmul.f32 %v702, 1.442695
        %v905 = vpow.pop %v904
        %v906 = vmul.f32 %v703, 1.442695
        %v907 = vpow.pop %v906
        %v908 = vmul.f32 %v704, 1.442695
        %v909 = vpow.pop %v908
        %v910 = vmul.f32 %v705, 1.442695
        %v911 = vpow.pop %v910
        %v912 = vmul.f32 %v706, 1.442695
        %v913 = vpow.pop %v912
        %v914 = vmul.f32 %v707, 1.442695
        %v915 = vpow.pop %v914
        %v916 = vmul.f32 %v708, 1.442695
        %v917 = vpow.pop %v916
        %v918 = vmul.f32 %v709, 1.442695
        %v919 = vpow.pop %v918
        %v920 = vmul.f32 %v710, 1.442695
        %v921 = vpow.pop %v920
        %v922 = vmul.f32 %v711, 1.442695
        %v923 = vpow.pop %v922
        %v924 = vmul.f32 %v712, 1.442695
        %v925 = vpow.pop %v924
        %v926 = vmul.f32 %v713, 1.442695
        %v927 = vpow.pop %v926
        %v928 = vmul.f32 %v714, 1.442695
        %v929 = vpow.pop %v928
        %v930 = vmul.f32 %v715, 1.442695
        %v931 = vpow.pop %v930
        %v932 = vmul.f32 %v716, 1.442695
        %v933 = vpow.pop %v932
        %v934 = vmul.f32 %v717, 1.442695
        %v935 = vpow.pop %v934
        %v936 = vmul.f32 %v718, 1.442695
        %v937 = vpow.pop %v936
        %v938 = vmul.f32 %v719, 1.442695
        %v939 = vpow.pop %v938
        %v940 = vmul.f32 %v720, 1.442695
        %v941 = vpow.pop %v940
        %v942 = vmul.f32 %v721, 1.442695
        %v943 = vpow.pop %v942
        %v944 = vmul.f32 %v722, 1.442695
        %v945 = vpow.pop %v944
        %v946 = vmul.f32 %v723, 1.442695
        %v947 = vpow.pop %v946
        %v948 = vmul.f32 %v724, 1.442695
        %v949 = vpow.pop %v948
        %v950 = vmul.f32 %v725, 1.442695
        %v951 = vpow.pop %v950
        %v952 = vmul.f32 %v726, 1.442695
        %v953 = vpow.pop %v952
        %v954 = vmul.f32 %v727, 1.442695
        %v955 = vpow.pop %v954
        %v956 = vmul.f32 %v728, 1.442695
        %v957 = vpow.pop %v956
        %v958 = vmul.f32 %v729, 1.442695
        %v959 = vpow.pop %v958
        %v960 = vmul.f32 %v730, 1.442695
        %v961 = vpow.pop %v960
        %v962 = vmul.f32 %v731, 1.442695
        %v963 = vpow.pop %v962
        %v964 = vmul.f32 %v732, 1.442695
        %v965 = vpow.pop %v964
        %v966 = vmul.f32 %v733, 1.442695
        %v967 = vpow.pop %v966
        %v968 = vmul.f32 %v734, 1.442695
        %v969 = vpow.pop %v968
        %v970 = vmul.f32 %v735, 1.442695
        %v971 = vpow.pop %v970
        %v972 = vmul.f32 %v736, 1.442695
        %v973 = vpow.pop %v972
        %v974 = vmul.f32 %v737, 1.442695
        %v975 = vpow.pop %v974
        %v976 = vmul.f32 %v738, 1.442695
        %v977 = vpow.pop %v976
        %v978 = vmul.f32 %v739, 1.442695
        %v979 = vpow.pop %v978
        %v980 = vmul.f32 %v740, 1.442695
        %v981 = vpow.pop %v980
        %v982 = vmul.f32 %v741, 1.442695
        %v983 = vpow.pop %v982
        %v984 = vmul.f32 %v742, 1.442695
        %v985 = vpow.pop %v984
        %v986 = vmul.f32 %v743, 1.442695
        %v987 = vpow.pop %v986
        %v988 = vmul.f32 %v744, 1.442695
        %v989 = vpow.pop %v988
        %v990 = vmul.f32 %v745, 1.442695
        %v991 = vpow.pop %v990
        %v992 = vmul.f32 %v746, 1.442695
        %v993 = vpow.pop %v992
        %v994 = vmul.f32 %v747, 1.442695
        %v995 = vpow.pop %v994
        %v996 = vmul.f32 %v748, 1.442695
        %v997 = vpow.pop %v996
        %v998 = vmul.f32 %v749, 1.442695
        %v999 = vpow.pop %v998
        %v1000 = vmul.f32 %v750, 1.442695
        %v1001 = vpow.pop %v1000
        %v1002 = vmul.f32 %v751, 1.442695
        %v1003 = vpow.pop %v1002
        %v1004 = vmul.f32 %v752, 1.442695
        %v1005 = vpow.pop %v1004
        %v1006 = vmul.f32 %v753, 1.442695
        %v1007 = vpow.pop %v1006
        %v1008 = vmul.f32 %v754, 1.442695
        %v1009 = vpow.pop %v1008
        %v1010 = vmul.f32 %v755, 1.442695
        %v1011 = vpow.pop %v1010
        %v1012 = vmul.f32 %v756, 1.442695
        %v1013 = vpow.pop %v1012
        %v1014 = vmul.f32 %v757, 1.442695
        %v1015 = vpow.pop %v1014
        %v1016 = vmul.f32 %v758, 1.442695
        %v1017 = vpow.pop %v1016
        %v1018 = vmul.f32 %v759, 1.442695
        %v1019 = vpow.pop %v1018
        %v1020 = vmul.f32 %v760, 1.442695
        %v1021 = vpow.pop %v1020
        %v1022 = vmul.f32 %v761, 1.442695
        %v1023 = vpow.pop %v1022
        %v1024 = vmul.f32 %v762, 1.442695
        %v1025 = vpow.pop %v1024
        %v1026 = vmul.f32 %v763, 1.442695
        %v1027 = vpow.pop %v1026
        %v1028 = vmul.f32 %v764, 1.442695
        %v1029 = vpow.pop %v1028
        %v1030 = vmul.f32 %v765, 1.442695
        %v1031 = vpow.pop %v1030
        %v1032 = vmul.f32 %v766, 1.442695
        %v1033 = vpow.pop %v1032
        %v1034 = vmul.f32 %v767, 1.442695
        %v1035 = vpow.pop %v1034
        %v1036 = vmul.f32 %v768, 1.442695
        %v1037 = vpow.pop %v1036
        %v1038 = vmul.f32 %v769, 1.442695
        %v1039 = vpow.pop %v1038
        %v1040 = vmul.f32 %v770, 1.442695
        %v1041 = vpow.pop %v1040
        %v1042 = vmul.f32 %v771, 1.442695
        %v1043 = vpow.pop %v1042
        %v1044 = vmul.f32 %v772, 1.442695
        %v1045 = vpow.pop %v1044
        %v1046 = vmul.f32 %v773, 1.442695
        %v1047 = vpow.pop %v1046
        %v1048 = vmul.f32 %v774, 1.442695
        %v1049 = vpow.pop %v1048
        %v1050 = vmul.f32 %v775, 1.442695
        %v1051 = vpow.pop %v1050
        %v1052 = vmul.f32 %v776, 1.442695
        %v1053 = vpow.pop %v1052
        %v1054 = vmul.f32 %v777, 1.442695
        %v1055 = vpow.pop %v1054
        %v1056 = vmul.f32 %v778, 1.442695
        %v1057 = vpow.pop %v1056
        %v1058 = vmul.f32 %v779, 1.442695
        %v1059 = vpow.pop %v1058
        %v1060 = vmul.f32 %v780, 1.442695
        %v1061 = vpow.pop %v1060
        %v1062 = vmul.f32 %v781, 1.442695
        %v1063 = vpow.pop %v1062
        %v1064 = vmul.f32 %v782, 1.442695
        %v1065 = vpow.pop %v1064
        %v1066 = vmul.f32 %v783, 1.442695
        %v1067 = vpow.pop %v1066
        %v1068 = vmul.f32 %v784, 1.442695
        %v1069 = vpow.pop %v1068
        %v1070 = vmul.f32 %v785, 1.442695
        %v1071 = vpow.pop %v1070
        %v1072 = vmul.f32 %v786, 1.442695
        %v1073 = vpow.pop %v1072
        %v1074 = vmul.f32 %v787, 1.442695
        %v1075 = vpow.pop %v1074
        %v1076 = vpack.c.bf16 %v795, %v789
        %v1077 = vpack.c.bf16 %v797, %v791
        %v1078 = vpack.c.bf16 %v799, %v793
        %v1079 = vpack.c.bf16 %v807, %v801
        %v1080 = vpack.c.bf16 %v809, %v803
        %v1081 = vpack.c.bf16 %v811, %v805
        %v1082 = vpack.c.bf16 %v819, %v813
        %v1083 = vpack.c.bf16 %v821, %v815
        %v1084 = vpack.c.bf16 %v823, %v817
        %v1085 = vpack.c.bf16 %v831, %v825
        %v1086 = vpack.c.bf16 %v833, %v827
        %v1087 = vpack.c.bf16 %v835, %v829
        %v1088 = vpack.c.bf16 %v843, %v837
        %v1089 = vpack.c.bf16 %v845, %v839
        %v1090 = vpack.c.bf16 %v847, %v841
        %v1091 = vpack.c.bf16 %v855, %v849
        %v1092 = vpack.c.bf16 %v857, %v851
        %v1093 = vpack.c.bf16 %v859, %v853
        %v1094 = vpack.c.bf16 %v867, %v861
        %v1095 = vpack.c.bf16 %v869, %v863
        %v1096 = vpack.c.bf16 %v871, %v865
        %v1097 = vpack.c.bf16 %v879, %v873
        %v1098 = vpack.c.bf16 %v881, %v875
        %v1099 = vpack.c.bf16 %v883, %v877
        %v1100 = vpack.c.bf16 %v891, %v885
        %v1101 = vpack.c.bf16 %v893, %v887
        %v1102 = vpack.c.bf16 %v895, %v889
        %v1103 = vpack.c.bf16 %v903, %v897
        %v1104 = vpack.c.bf16 %v905, %v899
        %v1105 = vpack.c.bf16 %v907, %v901
        %v1106 = vpack.c.bf16 %v915, %v909
        %v1107 = vpack.c.bf16 %v917, %v911
        %v1108 = vpack.c.bf16 %v919, %v913
        %v1109 = vpack.c.bf16 %v927, %v921
        %v1110 = vpack.c.bf16 %v929, %v923
        %v1111 = vpack.c.bf16 %v931, %v925
        %v1112 = vpack.c.bf16 %v939, %v933
        %v1113 = vpack.c.bf16 %v941, %v935
        %v1114 = vpack.c.bf16 %v943, %v937
        %v1115 = vpack.c.bf16 %v951, %v945
        %v1116 = vpack.c.bf16 %v953, %v947
        %v1117 = vpack.c.bf16 %v955, %v949
        %v1118 = vpack.c.bf16 %v963, %v957
        %v1119 = vpack.c.bf16 %v965, %v959
        %v1120 = vpack.c.bf16 %v967, %v961
        %v1121 = vpack.c.bf16 %v975, %v969
        %v1122 = vpack.c.bf16 %v977, %v971
        %v1123 = vpack.c.bf16 %v979, %v973
        %v1124 = vpack.c.bf16 %v987, %v981
        %v1125 = vpack.c.bf16 %v989, %v983
        %v1126 = vpack.c.bf16 %v991, %v985
        %v1127 = vpack.c.bf16 %v999, %v993
        %v1128 = vpack.c.bf16 %v1001, %v995
        %v1129 = vpack.c.bf16 %v1003, %v997
        %v1130 = vpack.c.bf16 %v1011, %v1005
        %v1131 = vpack.c.bf16 %v1013, %v1007
        %v1132 = vpack.c.bf16 %v1015, %v1009
        %v1133 = vpack.c.bf16 %v1023, %v1017
        %v1134 = vpack.c.bf16 %v1025, %v1019
        %v1135 = vpack.c.bf16 %v1027, %v1021
        %v1136 = vpack.c.bf16 %v1035, %v1029
        %v1137 = vpack.c.bf16 %v1037, %v1031
        %v1138 = vpack.c.bf16 %v1039, %v1033
        %v1139 = vpack.c.bf16 %v1047, %v1041
        %v1140 = vpack.c.bf16 %v1049, %v1043
        %v1141 = vpack.c.bf16 %v1051, %v1045
        %v1142 = vpack.c.bf16 %v1059, %v1053
        %v1143 = vpack.c.bf16 %v1061, %v1055
        %v1144 = vpack.c.bf16 %v1063, %v1057
        %v1145 = vpack.c.bf16 %v1071, %v1065
        %v1146 = vpack.c.bf16 %v1073, %v1067
        %v1147 = vpack.c.bf16 %v1075, %v1069
        %v1148 = vld [vmem:[#allocation2] sm:$0xff]
        %v1149 = vld [vmem:[#allocation2 + $0x8] sm:$0xff]
        %v1150 = vld [vmem:[#allocation2 + $0x10] sm:$0xff]
        %v1151 = vld [vmem:[#allocation2 + $0x18] sm:$0xff]
        %v1152 = vld [vmem:[#allocation2 + $0x20] sm:$0xff]
        %v1153 = vld [vmem:[#allocation2 + $0x28] sm:$0xff]
        %v1154 = vld [vmem:[#allocation2 + $0x30] sm:$0xff]
        %v1155 = vld [vmem:[#allocation2 + $0x38] sm:$0xff]
        %v1156 = vld [vmem:[#allocation2 + $0x40] sm:$0xff]
        %v1157 = vld [vmem:[#allocation2 + $0x48] sm:$0xff]
        %v1158 = vld [vmem:[#allocation2 + $0x50] sm:$0xff]
        %v1159 = vld [vmem:[#allocation2 + $0x58] sm:$0xff]
        %v1160 = vld [vmem:[#allocation2 + $0x60] sm:$0xff]
        %v1161 = vld [vmem:[#allocation2 + $0x68] sm:$0xff]
        %v1162 = vld [vmem:[#allocation2 + $0x70] sm:$0xff]
        %v1163 = vld [vmem:[#allocation2 + $0x78] sm:$0xff]
        %v1164 = vld [vmem:[#allocation2 + $0x80] sm:$0xff]
        %v1165 = vld [vmem:[#allocation2 + $0x88] sm:$0xff]
        %v1166 = vld [vmem:[#allocation2 + $0x90] sm:$0xff]
        %v1167 = vld [vmem:[#allocation2 + $0x98] sm:$0xff]
        %v1168 = vld [vmem:[#allocation2 + $0xa0] sm:$0xff]
        %v1169 = vld [vmem:[#allocation2 + $0xa8] sm:$0xff]
        %v1170 = vld [vmem:[#allocation2 + $0xb0] sm:$0xff]
        %v1171 = vld [vmem:[#allocation2 + $0xb8] sm:$0xff]
        %1172 = vmatprep.subr.bf16.mxu0 0
        %1173 = vmatpush1.bf16.msra.mxu0 %v1148
        %1174 = vmatprep.subr.bf16.mxu0 0
        %1175 = vmatpush1.bf16.msra.mxu0 %v1149
        %1176 = vmatprep.subr.bf16.mxu0 0
        %1177 = vmatpush1.bf16.msra.mxu0 %v1150
        %1178 = vmatprep.subr.bf16.mxu0 0
        %1179 = vmatpush1.bf16.msra.mxu0 %v1151
        %1180 = vmatprep.subr.bf16.mxu0 0
        %1181 = vmatpush1.bf16.msra.mxu0 %v1152
        %1182 = vmatprep.subr.bf16.mxu0 0
        %1183 = vmatpush1.bf16.msra.mxu0 %v1153
        %1184 = vmatprep.subr.bf16.mxu0 0
        %1185 = vmatpush1.bf16.msra.mxu0 %v1154
        %1186 = vmatprep.subr.bf16.mxu0 0
        %1187 = vmatpush1.bf16.msra.mxu0 %v1155
        %1188 = vmatprep.subr.bf16.mxu0 0
        %1189 = vmatpush1.bf16.msra.mxu0 %v1156
        %1190 = vmatprep.subr.bf16.mxu0 0
        %1191 = vmatpush1.bf16.msra.mxu0 %v1157
        %1192 = vmatprep.subr.bf16.mxu0 0
        %1193 = vmatpush1.bf16.msra.mxu0 %v1158
        %1194 = vmatprep.subr.bf16.mxu0 0
        %1195 = vmatpush1.bf16.msra.mxu0 %v1159
        %1196 = vmatprep.subr.bf16.mxu0 0
        %1197 = vmatpush1.bf16.msra.mxu0 %v1160
        %1198 = vmatprep.subr.bf16.mxu0 0
        %1199 = vmatpush1.bf16.msra.mxu0 %v1161
        %1200 = vmatprep.subr.bf16.mxu0 0
        %1201 = vmatpush1.bf16.msra.mxu0 %v1162
        %1202 = vmatprep.subr.bf16.mxu0 0
        %1203 = vmatpush1.bf16.msra.mxu0 %v1163
        %1204 = vmatprep.mubr.bf16.mxu0 %v1077
        %1205 = vmatmul.mubr.bf16.gmra.mrb[0].mxu0 %v1076
        %v1206 = vpop.f32.mrb[0].mxu0
        %v1207 = vadd.f32 0.0, %v1206
        %v1208 = vpop.f32.mrb[0].mxu0
        %v1209 = vpop.f32.mrb[0].mxu0
        %v1210 = vadd.f32 0.0, %v1209
        %v1211 = vpop.f32.mrb[0].mxu0
        %1212 = vmatprep.mubr.bf16.mxu0 %v1080
        %1213 = vmatmul.mubr.bf16.gmra.mrb[0].mxu0 %v1079
        %v1214 = vpop.f32.mrb[0].mxu0
        %v1215 = vadd.f32 0.0, %v1214
        %v1216 = vpop.f32.mrb[0].mxu0
        %v1217 = vpop.f32.mrb[0].mxu0
        %v1218 = vadd.f32 0.0, %v1217
        %v1219 = vpop.f32.mrb[0].mxu0
        %1220 = vmatprep.mubr.bf16.mxu0 %v1083
        %1221 = vmatmul.mubr.bf16.gmra.mrb[0].mxu0 %v1082
        %v1222 = vpop.f32.mrb[0].mxu0
        %v1223 = vadd.f32 0.0, %v1222
        %v1224 = vpop.f32.mrb[0].mxu0
        %v1225 = vpop.f32.mrb[0].mxu0
        %v1226 = vadd.f32 0.0, %v1225
        %v1227 = vpop.f32.mrb[0].mxu0
        %1228 = vmatprep.mubr.bf16.mxu0 %v1086
        %1229 = vmatmul.mubr.bf16.gmra.mrb[0].mxu0 %v1085
        %v1230 = vpop.f32.mrb[0].mxu0
        %v1231 = vadd.f32 0.0, %v1230
        %v1232 = vpop.f32.mrb[0].mxu0
        %v1233 = vpop.f32.mrb[0].mxu0
        %v1234 = vadd.f32 0.0, %v1233
        %v1235 = vpop.f32.mrb[0].mxu0
        %1236 = vmatprep.mubr.bf16.mxu0 %v1089
        %1237 = vmatmul.mubr.bf16.gmra.mrb[0].mxu0 %v1088
        %v1238 = vpop.f32.mrb[0].mxu0
        %v1239 = vadd.f32 0.0, %v1238
        %v1240 = vpop.f32.mrb[0].mxu0
        %v1241 = vpop.f32.mrb[0].mxu0
        %v1242 = vadd.f32 0.0, %v1241
        %v1243 = vpop.f32.mrb[0].mxu0
        %1244 = vmatprep.mubr.bf16.mxu0 %v1092
        %1245 = vmatmul.mubr.bf16.gmra.mrb[0].mxu0 %v1091
        %v1246 = vpop.f32.mrb[0].mxu0
        %v1247 = vadd.f32 0.0, %v1246
        %v1248 = vpop.f32.mrb[0].mxu0
        %v1249 = vpop.f32.mrb[0].mxu0
        %v1250 = vadd.f32 0.0, %v1249
        %v1251 = vpop.f32.mrb[0].mxu0
        %1252 = vmatprep.mubr.bf16.mxu0 %v1095
        %1253 = vmatmul.mubr.bf16.gmra.mrb[0].mxu0 %v1094
        %v1254 = vpop.f32.mrb[0].mxu0
        %v1255 = vadd.f32 0.0, %v1254
        %v1256 = vpop.f32.mrb[0].mxu0
        %v1257 = vpop.f32.mrb[0].mxu0
        %v1258 = vadd.f32 0.0, %v1257
        %v1259 = vpop.f32.mrb[0].mxu0
        %1260 = vmatprep.mubr.bf16.mxu0 %v1098
        %1261 = vmatmul.mubr.bf16.gmra.mrb[0].mxu0 %v1097
        %v1262 = vpop.f32.mrb[0].mxu0
        %v1263 = vadd.f32 0.0, %v1262
        %v1264 = vpop.f32.mrb[0].mxu0
        %v1265 = vpop.f32.mrb[0].mxu0
        %v1266 = vadd.f32 0.0, %v1265
        %v1267 = vpop.f32.mrb[0].mxu0
        %1268 = vmatprep.mubr.bf16.mxu0 %v1101
        %1269 = vmatmul.mubr.bf16.gmra.mrb[0].mxu0 %v1100
        %v1270 = vpop.f32.mrb[0].mxu0
        %v1271 = vadd.f32 0.0, %v1270
        %v1272 = vpop.f32.mrb[0].mxu0
        %v1273 = vpop.f32.mrb[0].mxu0
        %v1274 = vadd.f32 0.0, %v1273
        %v1275 = vpop.f32.mrb[0].mxu0
        %1276 = vmatprep.mubr.bf16.mxu0 %v1104
        %1277 = vmatmul.mubr.bf16.gmra.mrb[0].mxu0 %v1103
        %v1278 = vpop.f32.mrb[0].mxu0
        %v1279 = vadd.f32 0.0, %v1278
        %v1280 = vpop.f32.mrb[0].mxu0
        %v1281 = vpop.f32.mrb[0].mxu0
        %v1282 = vadd.f32 0.0, %v1281
        %v1283 = vpop.f32.mrb[0].mxu0
        %1284 = vmatprep.mubr.bf16.mxu0 %v1107
        %1285 = vmatmul.mubr.bf16.gmra.mrb[0].mxu0 %v1106
        %v1286 = vpop.f32.mrb[0].mxu0
        %v1287 = vadd.f32 0.0, %v1286
        %v1288 = vpop.f32.mrb[0].mxu0
        %v1289 = vpop.f32.mrb[0].mxu0
        %v1290 = vadd.f32 0.0, %v1289
        %v1291 = vpop.f32.mrb[0].mxu0
        %1292 = vmatprep.mubr.bf16.mxu0 %v1110
        %1293 = vmatmul.mubr.bf16.gmra.mrb[0].mxu0 %v1109
        %v1294 = vpop.f32.mrb[0].mxu0
        %v1295 = vadd.f32 0.0, %v1294
        %v1296 = vpop.f32.mrb[0].mxu0
        %v1297 = vpop.f32.mrb[0].mxu0
        %v1298 = vadd.f32 0.0, %v1297
        %v1299 = vpop.f32.mrb[0].mxu0
        %1300 = vmatprep.mubr.bf16.mxu0 %v1113
        %1301 = vmatmul.mubr.bf16.gmra.mrb[0].mxu0 %v1112
        %v1302 = vpop.f32.mrb[0].mxu0
        %v1303 = vadd.f32 0.0, %v1302
        %v1304 = vpop.f32.mrb[0].mxu0
        %v1305 = vpop.f32.mrb[0].mxu0
        %v1306 = vadd.f32 0.0, %v1305
        %v1307 = vpop.f32.mrb[0].mxu0
        %1308 = vmatprep.mubr.bf16.mxu0 %v1116
        %1309 = vmatmul.mubr.bf16.gmra.mrb[0].mxu0 %v1115
        %v1310 = vpop.f32.mrb[0].mxu0
        %v1311 = vadd.f32 0.0, %v1310
        %v1312 = vpop.f32.mrb[0].mxu0
        %v1313 = vpop.f32.mrb[0].mxu0
        %v1314 = vadd.f32 0.0, %v1313
        %v1315 = vpop.f32.mrb[0].mxu0
        %1316 = vmatprep.mubr.bf16.mxu0 %v1119
        %1317 = vmatmul.mubr.bf16.gmra.mrb[0].mxu0 %v1118
        %v1318 = vpop.f32.mrb[0].mxu0
        %v1319 = vadd.f32 0.0, %v1318
        %v1320 = vpop.f32.mrb[0].mxu0
        %v1321 = vpop.f32.mrb[0].mxu0
        %v1322 = vadd.f32 0.0, %v1321
        %v1323 = vpop.f32.mrb[0].mxu0
        %1324 = vmatprep.mubr.bf16.mxu0 %v1122
        %1325 = vmatmul.mubr.bf16.gmra.mrb[0].mxu0 %v1121
        %v1326 = vpop.f32.mrb[0].mxu0
        %v1327 = vadd.f32 0.0, %v1326
        %v1328 = vpop.f32.mrb[0].mxu0
        %v1329 = vpop.f32.mrb[0].mxu0
        %v1330 = vadd.f32 0.0, %v1329
        %v1331 = vpop.f32.mrb[0].mxu0
        %1332 = vmatprep.mubr.bf16.mxu0 %v1125
        %1333 = vmatmul.mubr.bf16.gmra.mrb[0].mxu0 %v1124
        %v1334 = vpop.f32.mrb[0].mxu0
        %v1335 = vadd.f32 0.0, %v1334
        %v1336 = vpop.f32.mrb[0].mxu0
        %v1337 = vpop.f32.mrb[0].mxu0
        %v1338 = vadd.f32 0.0, %v1337
        %v1339 = vpop.f32.mrb[0].mxu0
        %1340 = vmatprep.mubr.bf16.mxu0 %v1128
        %1341 = vmatmul.mubr.bf16.gmra.mrb[0].mxu0 %v1127
        %v1342 = vpop.f32.mrb[0].mxu0
        %v1343 = vadd.f32 0.0, %v1342
        %v1344 = vpop.f32.mrb[0].mxu0
        %v1345 = vpop.f32.mrb[0].mxu0
        %v1346 = vadd.f32 0.0, %v1345
        %v1347 = vpop.f32.mrb[0].mxu0
        %1348 = vmatprep.mubr.bf16.mxu0 %v1131
        %1349 = vmatmul.mubr.bf16.gmra.mrb[0].mxu0 %v1130
        %v1350 = vpop.f32.mrb[0].mxu0
        %v1351 = vadd.f32 0.0, %v1350
        %v1352 = vpop.f32.mrb[0].mxu0
        %v1353 = vpop.f32.mrb[0].mxu0
        %v1354 = vadd.f32 0.0, %v1353
        %v1355 = vpop.f32.mrb[0].mxu0
        %1356 = vmatprep.mubr.bf16.mxu0 %v1134
        %1357 = vmatmul.mubr.bf16.gmra.mrb[0].mxu0 %v1133
        %v1358 = vpop.f32.mrb[0].mxu0
        %v1359 = vadd.f32 0.0, %v1358
        %v1360 = vpop.f32.mrb[0].mxu0
        %v1361 = vpop.f32.mrb[0].mxu0
        %v1362 = vadd.f32 0.0, %v1361
        %v1363 = vpop.f32.mrb[0].mxu0
        %1364 = vmatprep.mubr.bf16.mxu0 %v1137
        %1365 = vmatmul.mubr.bf16.gmra.mrb[0].mxu0 %v1136
        %v1366 = vpop.f32.mrb[0].mxu0
        %v1367 = vadd.f32 0.0, %v1366
        %v1368 = vpop.f32.mrb[0].mxu0
        %v1369 = vpop.f32.mrb[0].mxu0
        %v1370 = vadd.f32 0.0, %v1369
        %v1371 = vpop.f32.mrb[0].mxu0
        %1372 = vmatprep.mubr.bf16.mxu0 %v1140
        %1373 = vmatmul.mubr.bf16.gmra.mrb[0].mxu0 %v1139
        %v1374 = vpop.f32.mrb[0].mxu0
        %v1375 = vadd.f32 0.0, %v1374
        %v1376 = vpop.f32.mrb[0].mxu0
        %v1377 = vpop.f32.mrb[0].mxu0
        %v1378 = vadd.f32 0.0, %v1377
        %v1379 = vpop.f32.mrb[0].mxu0
        %1380 = vmatprep.mubr.bf16.mxu0 %v1143
        %1381 = vmatmul.mubr.bf16.gmra.mrb[0].mxu0 %v1142
        %v1382 = vpop.f32.mrb[0].mxu0
        %v1383 = vadd.f32 0.0, %v1382
        %v1384 = vpop.f32.mrb[0].mxu0
        %v1385 = vpop.f32.mrb[0].mxu0
        %v1386 = vadd.f32 0.0, %v1385
        %v1387 = vpop.f32.mrb[0].mxu0
        %1388 = vmatprep.mubr.bf16.mxu0 %v1146
        %1389 = vmatmul.mubr.bf16.gmra.mrb[0].mxu0 %v1145
        %v1390 = vpop.f32.mrb[0].mxu0
        %v1391 = vadd.f32 0.0, %v1390
        %v1392 = vpop.f32.mrb[0].mxu0
        %v1393 = vpop.f32.mrb[0].mxu0
        %v1394 = vadd.f32 0.0, %v1393
        %v1395 = vpop.f32.mrb[0].mxu0
        %1396 = vdwg.mxu0
        %1397 = vmatprep.subr.bf16.mxu0 0
        %1398 = vmatpush1.bf16.msra.mxu0 %v1164
        %1399 = vmatprep.subr.bf16.mxu0 0
        %1400 = vmatpush1.bf16.msra.mxu0 %v1165
        %1401 = vmatprep.subr.bf16.mxu0 0
        %1402 = vmatpush1.bf16.msra.mxu0 %v1166
        %1403 = vmatprep.subr.bf16.mxu0 0
        %1404 = vmatpush1.bf16.msra.mxu0 %v1167
        %1405 = vmatprep.subr.bf16.mxu0 0
        %1406 = vmatpush1.bf16.msra.mxu0 %v1168
        %1407 = vmatprep.subr.bf16.mxu0 0
        %1408 = vmatpush1.bf16.msra.mxu0 %v1169
        %1409 = vmatprep.subr.bf16.mxu0 0
        %1410 = vmatpush1.bf16.msra.mxu0 %v1170
        %1411 = vmatprep.subr.bf16.mxu0 0
        %1412 = vmatpush1.bf16.msra.mxu0 %v1171
        %1413 = vmatprep.subr.bf16.mxu0 0
        %1414 = vmatpush1.bf16.msra.mxu0 0
        %1415 = vmatprep.subr.bf16.mxu0 0
        %1416 = vmatpush1.bf16.msra.mxu0 0
        %1417 = vmatprep.subr.bf16.mxu0 0
        %1418 = vmatpush1.bf16.msra.mxu0 0
        %1419 = vmatprep.subr.bf16.mxu0 0
        %1420 = vmatpush1.bf16.msra.mxu0 0
        %1421 = vmatprep.subr.bf16.mxu0 0
        %1422 = vmatpush1.bf16.msra.mxu0 0
        %1423 = vmatprep.subr.bf16.mxu0 0
        %1424 = vmatpush1.bf16.msra.mxu0 0
        %1425 = vmatprep.subr.bf16.mxu0 0
        %1426 = vmatpush1.bf16.msra.mxu0 0
        %1427 = vmatprep.subr.bf16.mxu0 0
        %1428 = vmatpush1.bf16.msra.mxu0 0
        %1429 = vmatprep.mubr.bf16.mxu0 0
        %1430 = vmatmul.mubr.bf16.gmra.mrb[0].mxu0 %v1078
        %v1431 = vpop.f32.mrb[0].mxu0
        %v1432 = vadd.f32 %v1207, %v1431
        %v1433 = vpop.f32.mrb[0].mxu0
        %v1434 = vpop.f32.mrb[0].mxu0
        %v1435 = vadd.f32 %v1210, %v1434
        %v1436 = vpop.f32.mrb[0].mxu0
        %1437 = vmatprep.mubr.bf16.mxu0 0
        %1438 = vmatmul.mubr.bf16.gmra.mrb[0].mxu0 %v1081
        %v1439 = vpop.f32.mrb[0].mxu0
        %v1440 = vadd.f32 %v1215, %v1439
        %v1441 = vpop.f32.mrb[0].mxu0
        %v1442 = vpop.f32.mrb[0].mxu0
        %v1443 = vadd.f32 %v1218, %v1442
        %v1444 = vpop.f32.mrb[0].mxu0
        %1445 = vmatprep.mubr.bf16.mxu0 0
        %1446 = vmatmul.mubr.bf16.gmra.mrb[0].mxu0 %v1084
        %v1447 = vpop.f32.mrb[0].mxu0
        %v1448 = vadd.f32 %v1223, %v1447
        %v1449 = vpop.f32.mrb[0].mxu0
        %v1450 = vpop.f32.mrb[0].mxu0
        %v1451 = vadd.f32 %v1226, %v1450
        %v1452 = vpop.f32.mrb[0].mxu0
        %1453 = vmatprep.mubr.bf16.mxu0 0
        %1454 = vmatmul.mubr.bf16.gmra.mrb[0].mxu0 %v1087
        %v1455 = vpop.f32.mrb[0].mxu0
        %v1456 = vadd.f32 %v1231, %v1455
        %v1457 = vpop.f32.mrb[0].mxu0
        %v1458 = vpop.f32.mrb[0].mxu0
        %v1459 = vadd.f32 %v1234, %v1458
        %v1460 = vpop.f32.mrb[0].mxu0
        %1461 = vmatprep.mubr.bf16.mxu0 0
        %1462 = vmatmul.mubr.bf16.gmra.mrb[0].mxu0 %v1090
        %v1463 = vpop.f32.mrb[0].mxu0
        %v1464 = vadd.f32 %v1239, %v1463
        %v1465 = vpop.f32.mrb[0].mxu0
        %v1466 = vpop.f32.mrb[0].mxu0
        %v1467 = vadd.f32 %v1242, %v1466
        %v1468 = vpop.f32.mrb[0].mxu0
        %1469 = vmatprep.mubr.bf16.mxu0 0
        %1470 = vmatmul.mubr.bf16.gmra.mrb[0].mxu0 %v1093
        %v1471 = vpop.f32.mrb[0].mxu0
        %v1472 = vadd.f32 %v1247, %v1471
        %v1473 = vpop.f32.mrb[0].mxu0
        %v1474 = vpop.f32.mrb[0].mxu0
        %v1475 = vadd.f32 %v1250, %v1474
        %v1476 = vpop.f32.mrb[0].mxu0
        %1477 = vmatprep.mubr.bf16.mxu0 0
        %1478 = vmatmul.mubr.bf16.gmra.mrb[0].mxu0 %v1096
        %v1479 = vpop.f32.mrb[0].mxu0
        %v1480 = vadd.f32 %v1255, %v1479
        %v1481 = vpop.f32.mrb[0].mxu0
        %v1482 = vpop.f32.mrb[0].mxu0
        %v1483 = vadd.f32 %v1258, %v1482
        %v1484 = vpop.f32.mrb[0].mxu0
        %1485 = vmatprep.mubr.bf16.mxu0 0
        %1486 = vmatmul.mubr.bf16.gmra.mrb[0].mxu0 %v1099
        %v1487 = vpop.f32.mrb[0].mxu0
        %v1488 = vadd.f32 %v1263, %v1487
        %v1489 = vpop.f32.mrb[0].mxu0
        %v1490 = vpop.f32.mrb[0].mxu0
        %v1491 = vadd.f32 %v1266, %v1490
        %v1492 = vpop.f32.mrb[0].mxu0
        %1493 = vmatprep.mubr.bf16.mxu0 0
        %1494 = vmatmul.mubr.bf16.gmra.mrb[0].mxu0 %v1102
        %v1495 = vpop.f32.mrb[0].mxu0
        %v1496 = vadd.f32 %v1271, %v1495
        %v1497 = vpop.f32.mrb[0].mxu0
        %v1498 = vpop.f32.mrb[0].mxu0
        %v1499 = vadd.f32 %v1274, %v1498
        %v1500 = vpop.f32.mrb[0].mxu0
        %1501 = vmatprep.mubr.bf16.mxu0 0
        %1502 = vmatmul.mubr.bf16.gmra.mrb[0].mxu0 %v1105
        %v1503 = vpop.f32.mrb[0].mxu0
        %v1504 = vadd.f32 %v1279, %v1503
        %v1505 = vpop.f32.mrb[0].mxu0
        %v1506 = vpop.f32.mrb[0].mxu0
        %v1507 = vadd.f32 %v1282, %v1506
        %v1508 = vpop.f32.mrb[0].mxu0
        %1509 = vmatprep.mubr.bf16.mxu0 0
        %1510 = vmatmul.mubr.bf16.gmra.mrb[0].mxu0 %v1108
        %v1511 = vpop.f32.mrb[0].mxu0
        %v1512 = vadd.f32 %v1287, %v1511
        %v1513 = vpop.f32.mrb[0].mxu0
        %v1514 = vpop.f32.mrb[0].mxu0
        %v1515 = vadd.f32 %v1290, %v1514
        %v1516 = vpop.f32.mrb[0].mxu0
        %1517 = vmatprep.mubr.bf16.mxu0 0
        %1518 = vmatmul.mubr.bf16.gmra.mrb[0].mxu0 %v1111
        %v1519 = vpop.f32.mrb[0].mxu0
        %v1520 = vadd.f32 %v1295, %v1519
        %v1521 = vpop.f32.mrb[0].mxu0
        %v1522 = vpop.f32.mrb[0].mxu0
        %v1523 = vadd.f32 %v1298, %v1522
        %v1524 = vpop.f32.mrb[0].mxu0
        %1525 = vmatprep.mubr.bf16.mxu0 0
        %1526 = vmatmul.mubr.bf16.gmra.mrb[0].mxu0 %v1114
        %v1527 = vpop.f32.mrb[0].mxu0
        %v1528 = vadd.f32 %v1303, %v1527
        %v1529 = vpop.f32.mrb[0].mxu0
        %v1530 = vpop.f32.mrb[0].mxu0
        %v1531 = vadd.f32 %v1306, %v1530
        %v1532 = vpop.f32.mrb[0].mxu0
        %1533 = vmatprep.mubr.bf16.mxu0 0
        %1534 = vmatmul.mubr.bf16.gmra.mrb[0].mxu0 %v1117
        %v1535 = vpop.f32.mrb[0].mxu0
        %v1536 = vadd.f32 %v1311, %v1535
        %v1537 = vpop.f32.mrb[0].mxu0
        %v1538 = vpop.f32.mrb[0].mxu0
        %v1539 = vadd.f32 %v1314, %v1538
        %v1540 = vpop.f32.mrb[0].mxu0
        %1541 = vmatprep.mubr.bf16.mxu0 0
        %1542 = vmatmul.mubr.bf16.gmra.mrb[0].mxu0 %v1120
        %v1543 = vpop.f32.mrb[0].mxu0
        %v1544 = vadd.f32 %v1319, %v1543
        %v1545 = vpop.f32.mrb[0].mxu0
        %v1546 = vpop.f32.mrb[0].mxu0
        %v1547 = vadd.f32 %v1322, %v1546
        %v1548 = vpop.f32.mrb[0].mxu0
        %1549 = vmatprep.mubr.bf16.mxu0 0
        %1550 = vmatmul.mubr.bf16.gmra.mrb[0].mxu0 %v1123
        %v1551 = vpop.f32.mrb[0].mxu0
        %v1552 = vadd.f32 %v1327, %v1551
        %v1553 = vpop.f32.mrb[0].mxu0
        %v1554 = vpop.f32.mrb[0].mxu0
        %v1555 = vadd.f32 %v1330, %v1554
        %v1556 = vpop.f32.mrb[0].mxu0
        %1557 = vmatprep.mubr.bf16.mxu0 0
        %1558 = vmatmul.mubr.bf16.gmra.mrb[0].mxu0 %v1126
        %v1559 = vpop.f32.mrb[0].mxu0
        %v1560 = vadd.f32 %v1335, %v1559
        %v1561 = vpop.f32.mrb[0].mxu0
        %v1562 = vpop.f32.mrb[0].mxu0
        %v1563 = vadd.f32 %v1338, %v1562
        %v1564 = vpop.f32.mrb[0].mxu0
        %1565 = vmatprep.mubr.bf16.mxu0 0
        %1566 = vmatmul.mubr.bf16.gmra.mrb[0].mxu0 %v1129
        %v1567 = vpop.f32.mrb[0].mxu0
        %v1568 = vadd.f32 %v1343, %v1567
        %v1569 = vpop.f32.mrb[0].mxu0
        %v1570 = vpop.f32.mrb[0].mxu0
        %v1571 = vadd.f32 %v1346, %v1570
        %v1572 = vpop.f32.mrb[0].mxu0
        %1573 = vmatprep.mubr.bf16.mxu0 0
        %1574 = vmatmul.mubr.bf16.gmra.mrb[0].mxu0 %v1132
        %v1575 = vpop.f32.mrb[0].mxu0
        %v1576 = vadd.f32 %v1351, %v1575
        %v1577 = vpop.f32.mrb[0].mxu0
        %v1578 = vpop.f32.mrb[0].mxu0
        %v1579 = vadd.f32 %v1354, %v1578
        %v1580 = vpop.f32.mrb[0].mxu0
        %1581 = vmatprep.mubr.bf16.mxu0 0
        %1582 = vmatmul.mubr.bf16.gmra.mrb[0].mxu0 %v1135
        %v1583 = vpop.f32.mrb[0].mxu0
        %v1584 = vadd.f32 %v1359, %v1583
        %v1585 = vpop.f32.mrb[0].mxu0
        %v1586 = vpop.f32.mrb[0].mxu0
        %v1587 = vadd.f32 %v1362, %v1586
        %v1588 = vpop.f32.mrb[0].mxu0
        %1589 = vmatprep.mubr.bf16.mxu0 0
        %1590 = vmatmul.mubr.bf16.gmra.mrb[0].mxu0 %v1138
        %v1591 = vpop.f32.mrb[0].mxu0
        %v1592 = vadd.f32 %v1367, %v1591
        %v1593 = vpop.f32.mrb[0].mxu0
        %v1594 = vpop.f32.mrb[0].mxu0
        %v1595 = vadd.f32 %v1370, %v1594
        %v1596 = vpop.f32.mrb[0].mxu0
        %1597 = vmatprep.mubr.bf16.mxu0 0
        %1598 = vmatmul.mubr.bf16.gmra.mrb[0].mxu0 %v1141
        %v1599 = vpop.f32.mrb[0].mxu0
        %v1600 = vadd.f32 %v1375, %v1599
        %v1601 = vpop.f32.mrb[0].mxu0
        %v1602 = vpop.f32.mrb[0].mxu0
        %v1603 = vadd.f32 %v1378, %v1602
        %v1604 = vpop.f32.mrb[0].mxu0
        %1605 = vmatprep.mubr.bf16.mxu0 0
        %1606 = vmatmul.mubr.bf16.gmra.mrb[0].mxu0 %v1144
        %v1607 = vpop.f32.mrb[0].mxu0
        %v1608 = vadd.f32 %v1383, %v1607
        %v1609 = vpop.f32.mrb[0].mxu0
        %v1610 = vpop.f32.mrb[0].mxu0
        %v1611 = vadd.f32 %v1386, %v1610
        %v1612 = vpop.f32.mrb[0].mxu0
        %1613 = vmatprep.mubr.bf16.mxu0 0
        %1614 = vmatmul.mubr.bf16.gmra.mrb[0].mxu0 %v1147
        %v1615 = vpop.f32.mrb[0].mxu0
        %v1616 = vadd.f32 %v1391, %v1615
        %v1617 = vpop.f32.mrb[0].mxu0
        %v1618 = vpop.f32.mrb[0].mxu0
        %v1619 = vadd.f32 %v1394, %v1618
        %v1620 = vpop.f32.mrb[0].mxu0
        %1621 = vdwg.mxu0
        %v1622 = vrcp.pop %v1432
        %v1623 = vrcp.pop %v1435
        %v1624 = vrcp.pop %v1440
        %v1625 = vrcp.pop %v1443
        %v1626 = vrcp.pop %v1448
        %v1627 = vrcp.pop %v1451
        %v1628 = vrcp.pop %v1456
        %v1629 = vrcp.pop %v1459
        %v1630 = vrcp.pop %v1464
        %v1631 = vrcp.pop %v1467
        %v1632 = vrcp.pop %v1472
        %v1633 = vrcp.pop %v1475
        %v1634 = vrcp.pop %v1480
        %v1635 = vrcp.pop %v1483
        %v1636 = vrcp.pop %v1488
        %v1637 = vrcp.pop %v1491
        %v1638 = vrcp.pop %v1496
        %v1639 = vrcp.pop %v1499
        %v1640 = vrcp.pop %v1504
        %v1641 = vrcp.pop %v1507
        %v1642 = vrcp.pop %v1512
        %v1643 = vrcp.pop %v1515
        %v1644 = vrcp.pop %v1520
        %v1645 = vrcp.pop %v1523
        %v1646 = vrcp.pop %v1528
        %v1647 = vrcp.pop %v1531
        %v1648 = vrcp.pop %v1536
        %v1649 = vrcp.pop %v1539
        %v1650 = vrcp.pop %v1544
        %v1651 = vrcp.pop %v1547
        %v1652 = vrcp.pop %v1552
        %v1653 = vrcp.pop %v1555
        %v1654 = vrcp.pop %v1560
        %v1655 = vrcp.pop %v1563
        %v1656 = vrcp.pop %v1568
        %v1657 = vrcp.pop %v1571
        %v1658 = vrcp.pop %v1576
        %v1659 = vrcp.pop %v1579
        %v1660 = vrcp.pop %v1584
        %v1661 = vrcp.pop %v1587
        %v1662 = vrcp.pop %v1592
        %v1663 = vrcp.pop %v1595
        %v1664 = vrcp.pop %v1600
        %v1665 = vrcp.pop %v1603
        %v1666 = vrcp.pop %v1608
        %v1667 = vrcp.pop %v1611
        %v1668 = vrcp.pop %v1616
        %v1669 = vrcp.pop %v1619
        %1718 = vrot.lane.b32.xlu0 %v1622, 64
        %v1719 = vpop.permute.xlu0 %1718
        %1720 = vrot.lane.b32.xlu0 %v1623, 64
        %v1721 = vpop.permute.xlu0 %1720
        %1722 = vrot.lane.b32.xlu0 %v1624, 64
        %v1723 = vpop.permute.xlu0 %1722
        %1724 = vrot.lane.b32.xlu0 %v1625, 64
        %v1725 = vpop.permute.xlu0 %1724
        %1726 = vrot.lane.b32.xlu0 %v1626, 64
        %v1727 = vpop.permute.xlu0 %1726
        %1728 = vrot.lane.b32.xlu0 %v1627, 64
        %v1729 = vpop.permute.xlu0 %1728
        %1730 = vrot.lane.b32.xlu0 %v1628, 64
        %v1731 = vpop.permute.xlu0 %1730
        %1732 = vrot.lane.b32.xlu0 %v1629, 64
        %v1733 = vpop.permute.xlu0 %1732
        %1734 = vrot.lane.b32.xlu0 %v1630, 64
        %v1735 = vpop.permute.xlu0 %1734
        %1736 = vrot.lane.b32.xlu0 %v1631, 64
        %v1737 = vpop.permute.xlu0 %1736
        %1738 = vrot.lane.b32.xlu0 %v1632, 64
        %v1739 = vpop.permute.xlu0 %1738
        %1740 = vrot.lane.b32.xlu0 %v1633, 64
        %v1741 = vpop.permute.xlu0 %1740
        %1742 = vrot.lane.b32.xlu0 %v1634, 64
        %v1743 = vpop.permute.xlu0 %1742
        %1744 = vrot.lane.b32.xlu0 %v1635, 64
        %v1745 = vpop.permute.xlu0 %1744
        %1746 = vrot.lane.b32.xlu0 %v1636, 64
        %v1747 = vpop.permute.xlu0 %1746
        %1748 = vrot.lane.b32.xlu0 %v1637, 64
        %v1749 = vpop.permute.xlu0 %1748
        %1750 = vrot.lane.b32.xlu0 %v1638, 64
        %v1751 = vpop.permute.xlu0 %1750
        %1752 = vrot.lane.b32.xlu0 %v1639, 64
        %v1753 = vpop.permute.xlu0 %1752
        %1754 = vrot.lane.b32.xlu0 %v1640, 64
        %v1755 = vpop.permute.xlu0 %1754
        %1756 = vrot.lane.b32.xlu0 %v1641, 64
        %v1757 = vpop.permute.xlu0 %1756
        %1758 = vrot.lane.b32.xlu0 %v1642, 64
        %v1759 = vpop.permute.xlu0 %1758
        %1760 = vrot.lane.b32.xlu0 %v1643, 64
        %v1761 = vpop.permute.xlu0 %1760
        %1762 = vrot.lane.b32.xlu0 %v1644, 64
        %v1763 = vpop.permute.xlu0 %1762
        %1764 = vrot.lane.b32.xlu0 %v1645, 64
        %v1765 = vpop.permute.xlu0 %1764
        %1766 = vrot.lane.b32.xlu0 %v1646, 64
        %v1767 = vpop.permute.xlu0 %1766
        %1768 = vrot.lane.b32.xlu0 %v1647, 64
        %v1769 = vpop.permute.xlu0 %1768
        %1770 = vrot.lane.b32.xlu0 %v1648, 64
        %v1771 = vpop.permute.xlu0 %1770
        %1772 = vrot.lane.b32.xlu0 %v1649, 64
        %v1773 = vpop.permute.xlu0 %1772
        %1774 = vrot.lane.b32.xlu0 %v1650, 64
        %v1775 = vpop.permute.xlu0 %1774
        %1776 = vrot.lane.b32.xlu0 %v1651, 64
        %v1777 = vpop.permute.xlu0 %1776
        %1778 = vrot.lane.b32.xlu0 %v1652, 64
        %v1779 = vpop.permute.xlu0 %1778
        %1780 = vrot.lane.b32.xlu0 %v1653, 64
        %v1781 = vpop.permute.xlu0 %1780
        %1782 = vrot.lane.b32.xlu0 %v1654, 64
        %v1783 = vpop.permute.xlu0 %1782
        %1784 = vrot.lane.b32.xlu0 %v1655, 64
        %v1785 = vpop.permute.xlu0 %1784
        %1786 = vrot.lane.b32.xlu0 %v1656, 64
        %v1787 = vpop.permute.xlu0 %1786
        %1788 = vrot.lane.b32.xlu0 %v1657, 64
        %v1789 = vpop.permute.xlu0 %1788
        %1790 = vrot.lane.b32.xlu0 %v1658, 64
        %v1791 = vpop.permute.xlu0 %1790
        %1792 = vrot.lane.b32.xlu0 %v1659, 64
        %v1793 = vpop.permute.xlu0 %1792
        %1794 = vrot.lane.b32.xlu0 %v1660, 64
        %v1795 = vpop.permute.xlu0 %1794
        %1796 = vrot.lane.b32.xlu0 %v1661, 64
        %v1797 = vpop.permute.xlu0 %1796
        %1798 = vrot.lane.b32.xlu0 %v1662, 64
        %v1799 = vpop.permute.xlu0 %1798
        %1800 = vrot.lane.b32.xlu0 %v1663, 64
        %v1801 = vpop.permute.xlu0 %1800
        %1802 = vrot.lane.b32.xlu0 %v1664, 64
        %v1803 = vpop.permute.xlu0 %1802
        %1804 = vrot.lane.b32.xlu0 %v1665, 64
        %v1805 = vpop.permute.xlu0 %1804
        %1806 = vrot.lane.b32.xlu0 %v1666, 64
        %v1807 = vpop.permute.xlu0 %1806
        %1808 = vrot.lane.b32.xlu0 %v1667, 64
        %v1809 = vpop.permute.xlu0 %1808
        %1810 = vrot.lane.b32.xlu0 %v1668, 64
        %v1811 = vpop.permute.xlu0 %1810
        %1812 = vrot.lane.b32.xlu0 %v1669, 64
        %v1813 = vpop.permute.xlu0 %1812
        %v1862 = vmul.f32 %v1432, %v1719
        %v1863 = vmul.f32 %v1435, %v1721
        %v1864 = vmul.f32 %v1440, %v1723
        %v1865 = vmul.f32 %v1443, %v1725
        %v1866 = vmul.f32 %v1448, %v1727
        %v1867 = vmul.f32 %v1451, %v1729
        %v1868 = vmul.f32 %v1456, %v1731
        %v1869 = vmul.f32 %v1459, %v1733
        %v1870 = vmul.f32 %v1464, %v1735
        %v1871 = vmul.f32 %v1467, %v1737
        %v1872 = vmul.f32 %v1472, %v1739
        %v1873 = vmul.f32 %v1475, %v1741
        %v1874 = vmul.f32 %v1480, %v1743
        %v1875 = vmul.f32 %v1483, %v1745
        %v1876 = vmul.f32 %v1488, %v1747
        %v1877 = vmul.f32 %v1491, %v1749
        %v1878 = vmul.f32 %v1496, %v1751
        %v1879 = vmul.f32 %v1499, %v1753
        %v1880 = vmul.f32 %v1504, %v1755
        %v1881 = vmul.f32 %v1507, %v1757
        %v1882 = vmul.f32 %v1512, %v1759
        %v1883 = vmul.f32 %v1515, %v1761
        %v1884 = vmul.f32 %v1520, %v1763
        %v1885 = vmul.f32 %v1523, %v1765
        %v1886 = vmul.f32 %v1528, %v1767
        %v1887 = vmul.f32 %v1531, %v1769
        %v1888 = vmul.f32 %v1536, %v1771
        %v1889 = vmul.f32 %v1539, %v1773
        %v1890 = vmul.f32 %v1544, %v1775
        %v1891 = vmul.f32 %v1547, %v1777
        %v1892 = vmul.f32 %v1552, %v1779
        %v1893 = vmul.f32 %v1555, %v1781
        %v1894 = vmul.f32 %v1560, %v1783
        %v1895 = vmul.f32 %v1563, %v1785
        %v1896 = vmul.f32 %v1568, %v1787
        %v1897 = vmul.f32 %v1571, %v1789
        %v1898 = vmul.f32 %v1576, %v1791
        %v1899 = vmul.f32 %v1579, %v1793
        %v1900 = vmul.f32 %v1584, %v1795
        %v1901 = vmul.f32 %v1587, %v1797
        %v1902 = vmul.f32 %v1592, %v1799
        %v1903 = vmul.f32 %v1595, %v1801
        %v1904 = vmul.f32 %v1600, %v1803
        %v1905 = vmul.f32 %v1603, %v1805
        %v1906 = vmul.f32 %v1608, %v1807
        %v1907 = vmul.f32 %v1611, %v1809
        %v1908 = vmul.f32 %v1616, %v1811
        %v1909 = vmul.f32 %v1619, %v1813
        %1910 = vst.msk [vmem:[%s183] sm:$0xff] %vm258, %v1862
        %1911 = vst.msk [vmem:[%s183 + $0x8] sm:$0xff] %vm258, %v1863
        %1912 = vst.msk [vmem:[%s183 + $0x10] sm:$0xff] %vm258, %v1864
        %1913 = vst.msk [vmem:[%s183 + $0x18] sm:$0xff] %vm258, %v1865
        %1914 = vst.msk [vmem:[%s183 + $0x20] sm:$0xff] %vm258, %v1866
        %1915 = vst.msk [vmem:[%s183 + $0x28] sm:$0xff] %vm258, %v1867
        %1916 = vst.msk [vmem:[%s183 + $0x30] sm:$0xff] %vm258, %v1868
        %1917 = vst.msk [vmem:[%s183 + $0x38] sm:$0xff] %vm258, %v1869
        %1918 = vst.msk [vmem:[%s183 + $0x40] sm:$0xff] %vm258, %v1870
        %1919 = vst.msk [vmem:[%s183 + $0x48] sm:$0xff] %vm258, %v1871
        %1920 = vst.msk [vmem:[%s183 + $0x50] sm:$0xff] %vm258, %v1872
        %1921 = vst.msk [vmem:[%s183 + $0x58] sm:$0xff] %vm258, %v1873
        %1922 = vst.msk [vmem:[%s183 + $0x60] sm:$0xff] %vm258, %v1874
        %1923 = vst.msk [vmem:[%s183 + $0x68] sm:$0xff] %vm258, %v1875
        %1924 = vst.msk [vmem:[%s183 + $0x70] sm:$0xff] %vm258, %v1876
        %1925 = vst.msk [vmem:[%s183 + $0x78] sm:$0xff] %vm258, %v1877
        %1926 = vst.msk [vmem:[%s183 + $0x80] sm:$0xff] %vm258, %v1878
        %1927 = vst.msk [vmem:[%s183 + $0x88] sm:$0xff] %vm258, %v1879
        %1928 = vst.msk [vmem:[%s183 + $0x90] sm:$0xff] %vm258, %v1880
        %1929 = vst.msk [vmem:[%s183 + $0x98] sm:$0xff] %vm258, %v1881
        %1930 = vst.msk [vmem:[%s183 + $0xa0] sm:$0xff] %vm258, %v1882
        %1931 = vst.msk [vmem:[%s183 + $0xa8] sm:$0xff] %vm258, %v1883
        %1932 = vst.msk [vmem:[%s183 + $0xb0] sm:$0xff] %vm258, %v1884
        %1933 = vst.msk [vmem:[%s183 + $0xb8] sm:$0xff] %vm258, %v1885
        %1934 = vst.msk [vmem:[%s183 + $0xc0] sm:$0xff] %vm258, %v1886
        %1935 = vst.msk [vmem:[%s183 + $0xc8] sm:$0xff] %vm258, %v1887
        %1936 = vst.msk [vmem:[%s183 + $0xd0] sm:$0xff] %vm258, %v1888
        %1937 = vst.msk [vmem:[%s183 + $0xd8] sm:$0xff] %vm258, %v1889
        %1938 = vst.msk [vmem:[%s183 + $0xe0] sm:$0xff] %vm258, %v1890
        %1939 = vst.msk [vmem:[%s183 + $0xe8] sm:$0xff] %vm258, %v1891
        %1940 = vst.msk [vmem:[%s183 + $0xf0] sm:$0xff] %vm258, %v1892
        %1941 = vst.msk [vmem:[%s183 + $0xf8] sm:$0xff] %vm258, %v1893
        %1942 = vst.msk [vmem:[%s183 + $0x100] sm:$0xff] %vm258, %v1894
        %1943 = vst.msk [vmem:[%s183 + $0x108] sm:$0xff] %vm258, %v1895
        %1944 = vst.msk [vmem:[%s183 + $0x110] sm:$0xff] %vm258, %v1896
        %1945 = vst.msk [vmem:[%s183 + $0x118] sm:$0xff] %vm258, %v1897
        %1946 = vst.msk [vmem:[%s183 + $0x120] sm:$0xff] %vm258, %v1898
        %1947 = vst.msk [vmem:[%s183 + $0x128] sm:$0xff] %vm258, %v1899
        %1948 = vst.msk [vmem:[%s183 + $0x130] sm:$0xff] %vm258, %v1900
        %1949 = vst.msk [vmem:[%s183 + $0x138] sm:$0xff] %vm258, %v1901
        %1950 = vst.msk [vmem:[%s183 + $0x140] sm:$0xff] %vm258, %v1902
        %1951 = vst.msk [vmem:[%s183 + $0x148] sm:$0xff] %vm258, %v1903
        %1952 = vst.msk [vmem:[%s183 + $0x150] sm:$0xff] %vm258, %v1904
        %1953 = vst.msk [vmem:[%s183 + $0x158] sm:$0xff] %vm258, %v1905
        %1954 = vst.msk [vmem:[%s183 + $0x160] sm:$0xff] %vm258, %v1906
        %1955 = vst.msk [vmem:[%s183 + $0x168] sm:$0xff] %vm258, %v1907
        %1956 = vst.msk [vmem:[%s183 + $0x170] sm:$0xff] %vm258, %v1908
        %1957 = vst.msk [vmem:[%s183 + $0x178] sm:$0xff] %vm258, %v1909
        %p1958 = scmp.lt.s32.totalorder %s16, 3
        %s1959 = scalar_select %p1958, %s16, 3
        %s1960 = smul.addr %s1959, 48
        %s1961 = smul.addr %s1960, 8
        %s1962 = scalar_lea.vmem %s2, %s1961
        // Predicated region
        $region33: #{tpu_custom_call.1} parent=27 // pred_check
          %p1963 = pneg %p86
        $region34: #{tpu_custom_call.1} parent=27 // pred_check_branch
          %1965 = sbr.rel (%p1963) target = $region36
        $region35: #{tpu_custom_call.1} parent=27 // pred_region
          _
        $region36: #{tpu_custom_call.1} parent=27 // pred_fallthru
          _
      $region28: #{tpu_custom_call.1} parent=5 // pred_fallthru
        _
      %p1966 = scmp.le.s32.totalorder 2, %s11
      // Predicated region
      $region37: #{tpu_custom_call.1} parent=5 // pred_check
        %p1967 = pneg %p1966
      $region38: #{tpu_custom_call.1} parent=5 // pred_check_branch
        %1969 = sbr.rel (%p1967) target = $region40
      $region39: #{tpu_custom_call.1} parent=5 // pred_region
        %s1970 = ssub.s32 %s11, 2
        // Predicated region
        $region41: #{tpu_custom_call.1} parent=39 // pred_check
          %p1971 = pneg %p92
        $region42: #{tpu_custom_call.1} parent=39 // pred_check_branch
          %1973 = sbr.rel (%p1971) target = $region44
        $region43: #{tpu_custom_call.1} parent=39 // pred_region
          %p1974 = scmp.lt.s32.totalorder %s17, 3
          %s1975 = scalar_select %p1974, %s17, 3
          %s1976 = smul.addr %s1975, 48
          %s1977 = smul.addr %s1976, 8
          %s1978 = scalar_lea.vmem %s2, %s1977
        $region44: #{tpu_custom_call.1} parent=39 // pred_fallthru
          _
      $region40: #{tpu_custom_call.1} parent=5 // pred_fallthru
        _
    $region6: #{tpu_custom_call.1} parent=1 // loop_footer
      %s15 = sadd.s32 1, %s11
    $region7: #{tpu_custom_call.1} parent=1 // loop_footer_branch
      %10 = sbr.rel target = $region3
    $region8: #{tpu_custom_call.1} parent=1 // loop_exit
      _
    %1979 = vsyncpa [#allocation4], 1
    %s1980 = scalar_lea.sflag [#allocation4], 1
    %1981 = vsyncpa %s1980, 1

</llo_original>
